<compile_context>
chip_gen: v5e
topology: v5e:2x2
jax: 0.10.0
libtpu: 0.0.40
codegen_flags: <defaults>
</compile_context>

<pallas_src>
import functools

import jax
import jax.numpy as jnp
from jax.experimental import pallas as pl
from jax.experimental.pallas import tpu as pltpu


def _round_up(x, m):
    return ((x + m - 1) // m) * m


# ---------------------------------------------------------------------------
# Pallas kernel: fused patch extraction (lane rolls) + VPU multiply-accumulate
# ---------------------------------------------------------------------------
def _lc2d_kernel(feat_ref, w_ref, b_ref, o_ref, *, kernel_size, in_w):
    # feat_ref: (B, C_in, Lp)   lane l = row*in_w + col of the input image (zero-padded)
    # w_ref   : (P, C_out, Lp)  P = C_in*K*K; zero at lanes that are not an output loc
    # b_ref   : (C_out, Lp)     zero at lanes that are not an output location
    # o_ref   : (B, C_out, Lp)
    B, C_in, Lp = feat_ref.shape
    P, C_out, _ = w_ref.shape
    K = kernel_size

    bias = b_ref[...].astype(jnp.float32)                     # (C_out, Lp), 2 vregs

    for b in range(B):                                        # small static unroll
        acc = bias                                            # f32 accumulator
        for ci in range(C_in):
            # Hoisted sublane broadcast of one feature row (B*C_in = 8 total, NOT per
            # tap): (1, Lp) -> (C_out, Lp).
            row = jnp.broadcast_to(feat_ref[b, ci:ci + 1, :], (C_out, Lp))
            row = row.astype(jnp.float32)
            for kh in range(K):
                for kw in range(K):
                    d = kh * in_w + kw                        # static lane shift
                    # Left-shift by d (jnp.roll semantics): shifted[:, l] = row[:, l+d].
                    # Valid output lanes never read wrapped/padded data; invalid lanes
                    # are multiplied by zero weights.
                    shifted = row if d == 0 else pltpu.roll(row, shift=Lp - d, axis=1)
                    p = (ci * K + kh) * K + kw
                    # Pure elementwise VALU step: one mul + one add on 2 vregs.
                    acc = acc + shifted * w_ref[p].astype(jnp.float32)
        o_ref[b] = acc.astype(o_ref.dtype)


def _lc2d_pallas(feat_lanes, w_lanes, b_lanes, *, kernel_size, in_w):
    B, C_in, Lp = feat_lanes.shape
    P, C_out, _ = w_lanes.shape

    nbytes = lambda a: a.size * a.dtype.itemsize
    out_bytes = B * C_out * Lp * 4
    bytes_accessed = nbytes(feat_lanes) + nbytes(w_lanes) + nbytes(b_lanes) + out_bytes
    # Double-buffered blocks + headroom; clamp to v7x's 64 MiB physical VMEM.
    vmem_limit = int(min(max(2 * bytes_accessed + (1 << 20), 4 << 20), 64 << 20))

    kernel_fn = functools.partial(_lc2d_kernel, kernel_size=kernel_size, in_w=in_w)

    return pl.pallas_call(
        kernel_fn,
        out_shape=jax.ShapeDtypeStruct((B, C_out, Lp), jnp.float32),
        grid_spec=pltpu.PrefetchScalarGridSpec(
            num_scalar_prefetch=0,
            grid=(1,),        # whole working set (<1 MiB) lives in VMEM in one step
            in_specs=[
                pl.BlockSpec((B, C_in, Lp), lambda i: (0, 0, 0)),
                pl.BlockSpec((P, C_out, Lp), lambda i: (0, 0, 0)),
                pl.BlockSpec((C_out, Lp), lambda i: (0, 0)),
            ],
            out_specs=pl.BlockSpec((B, C_out, Lp), lambda i: (0, 0, 0)),
        ),
        compiler_params=pltpu.CompilerParams(
            dimension_semantics=("arbitrary",),
            vmem_limit_bytes=vmem_limit,
        ),
        cost_estimate=pl.CostEstimate(
            flops=2 * B * C_out * Lp * P,
            transcendentals=0,
            bytes_accessed=int(bytes_accessed),
        ),
    )(feat_lanes, w_lanes, b_lanes)


# ---------------------------------------------------------------------------
# One-time parameter re-layout (model-load time; NOT in the per-call hot path)
# ---------------------------------------------------------------------------
def prepare_lc2d_params(weights, bias, *, input_size, stride=1, param_dtype=jnp.float32):
    """(H_out,W_out,C_out,C_in,K,K)/(H_out,W_out,C_out) -> lane-major kernel layout.

    Returns w_lanes (P, C_out, Lp) and b_lanes (C_out, Lp) where lane
    l = x*stride*W + y*stride holds the parameters for output location (x, y)
    and all other lanes are zero.  Use param_dtype=jnp.bfloat16 on v6e/v7x to
    halve HBM traffic (the kernel accumulates in f32 regardless).
    """
    H, W = input_size
    h_out, w_out, c_out, c_in, K, _ = weights.shape
    P = c_in * K * K
    L = H * W
    Lp = _round_up(L, 128)
    row_end = (h_out - 1) * stride + 1
    col_end = (w_out - 1) * stride + 1

    # (h_out, w_out, c_out, c_in, K, K) -> (P, c_out, h_out, w_out), p = ci*K*K + kh*K + kw
    w_t = jnp.transpose(weights, (3, 4, 5, 2, 0, 1)).reshape(P, c_out, h_out, w_out)
    b_t = jnp.transpose(bias, (2, 0, 1))                      # (c_out, h_out, w_out)

    w_grid = jnp.zeros((P, c_out, H, W), param_dtype)
    w_grid = w_grid.at[:, :, 0:row_end:stride, 0:col_end:stride].set(w_t.astype(param_dtype))
    b_grid = jnp.zeros((c_out, H, W), param_dtype)
    b_grid = b_grid.at[:, 0:row_end:stride, 0:col_end:stride].set(b_t.astype(param_dtype))

    w_lanes = w_grid.reshape(P, c_out, L)
    b_lanes = b_grid.reshape(c_out, L)
    if Lp != L:
        w_lanes = jnp.pad(w_lanes, ((0, 0), (0, 0), (0, Lp - L)))
        b_lanes = jnp.pad(b_lanes, ((0, 0), (0, Lp - L)))
    return w_lanes, b_lanes


# ---------------------------------------------------------------------------
# Per-call forward: tiny reshape -> fused pallas_call -> tiny strided slice
# ---------------------------------------------------------------------------
@functools.partial(jax.jit, static_argnames=("input_size", "kernel_size", "stride", "padding"))
def locally_connected_2d(features, w_lanes, b_lanes, *, input_size, kernel_size,
                         stride=1, padding=0):
    """features (B,C_in,H,W) [NCHW], prepared params -> (B, C_out, H_out, W_out)."""
    if padding != 0:
        # The PyTorch forward never pads the input; padding only changes the output-size
        # formula, so padding > 0 would index out of range there as well.
        raise ValueError("LocallyConnected2d forward requires padding == 0")
    H, W = input_size
    B, C_in, fh, fw = features.shape
    assert (fh, fw) == (H, W), (fh, fw, H, W)
    K = kernel_size
    h_out = (H - K) // stride + 1
    w_out = (W - K) // stride + 1
    P, c_out, Lp = w_lanes.shape
    L = H * W
    assert P == C_in * K * K and Lp == _round_up(L, 128)

    # Flatten the spatial grid onto the lane axis (tiny: B*C_in*H*W elements).
    feat_lanes = features.reshape(B, C_in, L)
    if Lp != L:
        feat_lanes = jnp.pad(feat_lanes, ((0, 0), (0, 0), (0, Lp - L)))

    out_lanes = _lc2d_pallas(feat_lanes, w_lanes, b_lanes, kernel_size=K, in_w=W)

    # Gather the valid output locations back into NCHW (small strided slice, fused by XLA).
    out_grid = out_lanes[:, :, :L].reshape(B, c_out, H, W)
    return out_grid[:, :, 0:(h_out - 1) * stride + 1:stride,
                          0:(w_out - 1) * stride + 1:stride]


# ---------------------------------------------------------------------------
# Pure-JAX reference (direct transcription of the PyTorch loop) for checking.
# ---------------------------------------------------------------------------
def _reference(features, weights, bias, kernel_size, stride):
    h_out, w_out, c_out, c_in, K, _ = weights.shape
    B = features.shape[0]
    out = jnp.zeros((B, c_out, h_out, w_out), jnp.float32)
    for x in range(h_out):
        for y in range(w_out):
            patch = features[
                :, :, x * stride: x * stride + K, y * stride: y * stride + K
            ]
            val = jnp.sum(
                patch[:, None, :, :, :] * weights[x, y][None], axis=(2, 3, 4)
            ) + bias[x, y]
            out = out.at[:, :, x, y].set(val)
    return out


if __name__ == "__main__":
    # Module hyperparameters (padding=0, matching the PyTorch forward semantics).
    B, C_in, H, W = 2, 4, 16, 16
    C_out, K, stride, padding = 8, 3, 1, 0
    H_out = (H - K + 2 * padding) // stride + 1   # 14
    W_out = (W - K + 2 * padding) // stride + 1   # 14

    key = jax.random.PRNGKey(0)
    k_x, k_w, k_b = jax.random.split(key, 3)
    features = jax.random.normal(k_x, (B, C_in, H, W), jnp.float32)
    weights = jax.random.normal(k_w, (H_out, W_out, C_out, C_in, K, K), jnp.float32)
    bias = jax.random.normal(k_b, (H_out, W_out, C_out), jnp.float32)

    # One-time parameter re-layout at "model load" (outside the per-call hot path).
    w_lanes, b_lanes = prepare_lc2d_params(
        weights, bias, input_size=(H, W), stride=stride)
    w_lanes.block_until_ready(); b_lanes.block_until_ready()

    out = locally_connected_2d(
        features, w_lanes, b_lanes,
        input_size=(H, W), kernel_size=K, stride=stride, padding=padding)
    out = jax.block_until_ready(out)

    ref = _reference(features, weights, bias, K, stride)
    assert out.shape == (B, C_out, H_out, W_out), out.shape
    assert jnp.allclose(out, ref, atol=1e-4, rtol=1e-4), "mismatch vs reference"

    print("KERNEL_OK")
</pallas_src>

<mosaic_0001>
module attributes {stable_mosaic.version = 11 : i64} {
  func.func @_lc2d_kernel(%arg0: i32, %arg1: memref<2x4x256xf32, #tpu.memory_space<vmem>>, %arg2: memref<36x8x256xf32, #tpu.memory_space<vmem>>, %arg3: memref<8x256xf32, #tpu.memory_space<vmem>>, %arg4: memref<2x8x256xf32, #tpu.memory_space<vmem>>) attributes {dimension_semantics = [#tpu.dimension_semantics<arbitrary>], iteration_bounds = array<i64: 1>, scalar_prefetch = 0 : i64, scratch_operands = 0 : i64, tpu.core_type = #tpu.core_type<tc>, window_params = [{pipeline_mode = #tpu.pipeline_mode<synchronous>, transform_indices = @transform_0, window_bounds = array<i64: 2, 4, 256>}, {pipeline_mode = #tpu.pipeline_mode<synchronous>, transform_indices = @transform_1, window_bounds = array<i64: 36, 8, 256>}, {pipeline_mode = #tpu.pipeline_mode<synchronous>, transform_indices = @transform_2, window_bounds = array<i64: 8, 256>}, {pipeline_mode = #tpu.pipeline_mode<synchronous>, transform_indices = @transform_3, window_bounds = array<i64: 2, 8, 256>}]} {
    %c0 = arith.constant 0 : index
    %c0_0 = arith.constant 0 : index
    %0 = vector.load %arg3[%c0, %c0_0] : memref<8x256xf32, #tpu.memory_space<vmem>>, vector<8x256xf32>
    %c0_1 = arith.constant 0 : index
    %c0_2 = arith.constant 0 : index
    %c0_3 = arith.constant 0 : index
    %1 = vector.load %arg1[%c0_1, %c0_2, %c0_3] : memref<2x4x256xf32, #tpu.memory_space<vmem>>, vector<1x1x256xf32>
    %2 = vector.shape_cast %1 : vector<1x1x256xf32> to vector<1x256xf32>
    %3 = vector.shape_cast %2 : vector<1x256xf32> to vector<1x256xf32>
    %4 = vector.broadcast %3 : vector<1x256xf32> to vector<8x256xf32>
    %c0_4 = arith.constant 0 : index
    %c0_5 = arith.constant 0 : index
    %c0_6 = arith.constant 0 : index
    %5 = vector.load %arg2[%c0_4, %c0_5, %c0_6] : memref<36x8x256xf32, #tpu.memory_space<vmem>>, vector<1x8x256xf32>
    %6 = vector.shape_cast %5 : vector<1x8x256xf32> to vector<8x256xf32>
    %7 = arith.mulf %4, %6 : vector<8x256xf32>
    %8 = arith.addf %0, %7 : vector<8x256xf32>
    %c255_i32 = arith.constant 255 : i32
    %9 = tpu.dynamic_rotate %4 by %c255_i32 dim 1 : vector<8x256xf32>, i32 -> vector<8x256xf32>
    %c1 = arith.constant 1 : index
    %c0_7 = arith.constant 0 : index
    %c0_8 = arith.constant 0 : index
    %10 = vector.load %arg2[%c1, %c0_7, %c0_8] : memref<36x8x256xf32, #tpu.memory_space<vmem>>, vector<1x8x256xf32>
    %11 = vector.shape_cast %10 : vector<1x8x256xf32> to vector<8x256xf32>
    %12 = arith.mulf %9, %11 : vector<8x256xf32>
    %13 = arith.addf %8, %12 : vector<8x256xf32>
    %c254_i32 = arith.constant 254 : i32
    %14 = tpu.dynamic_rotate %4 by %c254_i32 dim 1 : vector<8x256xf32>, i32 -> vector<8x256xf32>
    %c2 = arith.constant 2 : index
    %c0_9 = arith.constant 0 : index
    %c0_10 = arith.constant 0 : index
    %15 = vector.load %arg2[%c2, %c0_9, %c0_10] : memref<36x8x256xf32, #tpu.memory_space<vmem>>, vector<1x8x256xf32>
    %16 = vector.shape_cast %15 : vector<1x8x256xf32> to vector<8x256xf32>
    %17 = arith.mulf %14, %16 : vector<8x256xf32>
    %18 = arith.addf %13, %17 : vector<8x256xf32>
    %c240_i32 = arith.constant 240 : i32
    %19 = tpu.dynamic_rotate %4 by %c240_i32 dim 1 : vector<8x256xf32>, i32 -> vector<8x256xf32>
    %c3 = arith.constant 3 : index
    %c0_11 = arith.constant 0 : index
    %c0_12 = arith.constant 0 : index
    %20 = vector.load %arg2[%c3, %c0_11, %c0_12] : memref<36x8x256xf32, #tpu.memory_space<vmem>>, vector<1x8x256xf32>
    %21 = vector.shape_cast %20 : vector<1x8x256xf32> to vector<8x256xf32>
    %22 = arith.mulf %19, %21 : vector<8x256xf32>
    %23 = arith.addf %18, %22 : vector<8x256xf32>
    %c239_i32 = arith.constant 239 : i32
    %24 = tpu.dynamic_rotate %4 by %c239_i32 dim 1 : vector<8x256xf32>, i32 -> vector<8x256xf32>
    %c4 = arith.constant 4 : index
    %c0_13 = arith.constant 0 : index
    %c0_14 = arith.constant 0 : index
    %25 = vector.load %arg2[%c4, %c0_13, %c0_14] : memref<36x8x256xf32, #tpu.memory_space<vmem>>, vector<1x8x256xf32>
    %26 = vector.shape_cast %25 : vector<1x8x256xf32> to vector<8x256xf32>
    %27 = arith.mulf %24, %26 : vector<8x256xf32>
    %28 = arith.addf %23, %27 : vector<8x256xf32>
    %c238_i32 = arith.constant 238 : i32
    %29 = tpu.dynamic_rotate %4 by %c238_i32 dim 1 : vector<8x256xf32>, i32 -> vector<8x256xf32>
    %c5 = arith.constant 5 : index
    %c0_15 = arith.constant 0 : index
    %c0_16 = arith.constant 0 : index
    %30 = vector.load %arg2[%c5, %c0_15, %c0_16] : memref<36x8x256xf32, #tpu.memory_space<vmem>>, vector<1x8x256xf32>
    %31 = vector.shape_cast %30 : vector<1x8x256xf32> to vector<8x256xf32>
    %32 = arith.mulf %29, %31 : vector<8x256xf32>
    %33 = arith.addf %28, %32 : vector<8x256xf32>
    %c224_i32 = arith.constant 224 : i32
    %34 = tpu.dynamic_rotate %4 by %c224_i32 dim 1 : vector<8x256xf32>, i32 -> vector<8x256xf32>
    %c6 = arith.constant 6 : index
    %c0_17 = arith.constant 0 : index
    %c0_18 = arith.constant 0 : index
    %35 = vector.load %arg2[%c6, %c0_17, %c0_18] : memref<36x8x256xf32, #tpu.memory_space<vmem>>, vector<1x8x256xf32>
    %36 = vector.shape_cast %35 : vector<1x8x256xf32> to vector<8x256xf32>
    %37 = arith.mulf %34, %36 : vector<8x256xf32>
    %38 = arith.addf %33, %37 : vector<8x256xf32>
    %c223_i32 = arith.constant 223 : i32
    %39 = tpu.dynamic_rotate %4 by %c223_i32 dim 1 : vector<8x256xf32>, i32 -> vector<8x256xf32>
    %c7 = arith.constant 7 : index
    %c0_19 = arith.constant 0 : index
    %c0_20 = arith.constant 0 : index
    %40 = vector.load %arg2[%c7, %c0_19, %c0_20] : memref<36x8x256xf32, #tpu.memory_space<vmem>>, vector<1x8x256xf32>
    %41 = vector.shape_cast %40 : vector<1x8x256xf32> to vector<8x256xf32>
    %42 = arith.mulf %39, %41 : vector<8x256xf32>
    %43 = arith.addf %38, %42 : vector<8x256xf32>
    %c222_i32 = arith.constant 222 : i32
    %44 = tpu.dynamic_rotate %4 by %c222_i32 dim 1 : vector<8x256xf32>, i32 -> vector<8x256xf32>
    %c8 = arith.constant 8 : index
    %c0_21 = arith.constant 0 : index
    %c0_22 = arith.constant 0 : index
    %45 = vector.load %arg2[%c8, %c0_21, %c0_22] : memref<36x8x256xf32, #tpu.memory_space<vmem>>, vector<1x8x256xf32>
    %46 = vector.shape_cast %45 : vector<1x8x256xf32> to vector<8x256xf32>
    %47 = arith.mulf %44, %46 : vector<8x256xf32>
    %48 = arith.addf %43, %47 : vector<8x256xf32>
    %c0_23 = arith.constant 0 : index
    %c1_24 = arith.constant 1 : index
    %c0_25 = arith.constant 0 : index
    %49 = vector.load %arg1[%c0_23, %c1_24, %c0_25] : memref<2x4x256xf32, #tpu.memory_space<vmem>>, vector<1x1x256xf32>
    %50 = vector.shape_cast %49 : vector<1x1x256xf32> to vector<1x256xf32>
    %51 = vector.shape_cast %50 : vector<1x256xf32> to vector<1x256xf32>
    %52 = vector.broadcast %51 : vector<1x256xf32> to vector<8x256xf32>
    %c9 = arith.constant 9 : index
    %c0_26 = arith.constant 0 : index
    %c0_27 = arith.constant 0 : index
    %53 = vector.load %arg2[%c9, %c0_26, %c0_27] : memref<36x8x256xf32, #tpu.memory_space<vmem>>, vector<1x8x256xf32>
    %54 = vector.shape_cast %53 : vector<1x8x256xf32> to vector<8x256xf32>
    %55 = arith.mulf %52, %54 : vector<8x256xf32>
    %56 = arith.addf %48, %55 : vector<8x256xf32>
    %c255_i32_28 = arith.constant 255 : i32
    %57 = tpu.dynamic_rotate %52 by %c255_i32_28 dim 1 : vector<8x256xf32>, i32 -> vector<8x256xf32>
    %c10 = arith.constant 10 : index
    %c0_29 = arith.constant 0 : index
    %c0_30 = arith.constant 0 : index
    %58 = vector.load %arg2[%c10, %c0_29, %c0_30] : memref<36x8x256xf32, #tpu.memory_space<vmem>>, vector<1x8x256xf32>
    %59 = vector.shape_cast %58 : vector<1x8x256xf32> to vector<8x256xf32>
    %60 = arith.mulf %57, %59 : vector<8x256xf32>
    %61 = arith.addf %56, %60 : vector<8x256xf32>
    %c254_i32_31 = arith.constant 254 : i32
    %62 = tpu.dynamic_rotate %52 by %c254_i32_31 dim 1 : vector<8x256xf32>, i32 -> vector<8x256xf32>
    %c11 = arith.constant 11 : index
    %c0_32 = arith.constant 0 : index
    %c0_33 = arith.constant 0 : index
    %63 = vector.load %arg2[%c11, %c0_32, %c0_33] : memref<36x8x256xf32, #tpu.memory_space<vmem>>, vector<1x8x256xf32>
    %64 = vector.shape_cast %63 : vector<1x8x256xf32> to vector<8x256xf32>
    %65 = arith.mulf %62, %64 : vector<8x256xf32>
    %66 = arith.addf %61, %65 : vector<8x256xf32>
    %c240_i32_34 = arith.constant 240 : i32
    %67 = tpu.dynamic_rotate %52 by %c240_i32_34 dim 1 : vector<8x256xf32>, i32 -> vector<8x256xf32>
    %c12 = arith.constant 12 : index
    %c0_35 = arith.constant 0 : index
    %c0_36 = arith.constant 0 : index
    %68 = vector.load %arg2[%c12, %c0_35, %c0_36] : memref<36x8x256xf32, #tpu.memory_space<vmem>>, vector<1x8x256xf32>
    %69 = vector.shape_cast %68 : vector<1x8x256xf32> to vector<8x256xf32>
    %70 = arith.mulf %67, %69 : vector<8x256xf32>
    %71 = arith.addf %66, %70 : vector<8x256xf32>
    %c239_i32_37 = arith.constant 239 : i32
    %72 = tpu.dynamic_rotate %52 by %c239_i32_37 dim 1 : vector<8x256xf32>, i32 -> vector<8x256xf32>
    %c13 = arith.constant 13 : index
    %c0_38 = arith.constant 0 : index
    %c0_39 = arith.constant 0 : index
    %73 = vector.load %arg2[%c13, %c0_38, %c0_39] : memref<36x8x256xf32, #tpu.memory_space<vmem>>, vector<1x8x256xf32>
    %74 = vector.shape_cast %73 : vector<1x8x256xf32> to vector<8x256xf32>
    %75 = arith.mulf %72, %74 : vector<8x256xf32>
    %76 = arith.addf %71, %75 : vector<8x256xf32>
    %c238_i32_40 = arith.constant 238 : i32
    %77 = tpu.dynamic_rotate %52 by %c238_i32_40 dim 1 : vector<8x256xf32>, i32 -> vector<8x256xf32>
    %c14 = arith.constant 14 : index
    %c0_41 = arith.constant 0 : index
    %c0_42 = arith.constant 0 : index
    %78 = vector.load %arg2[%c14, %c0_41, %c0_42] : memref<36x8x256xf32, #tpu.memory_space<vmem>>, vector<1x8x256xf32>
    %79 = vector.shape_cast %78 : vector<1x8x256xf32> to vector<8x256xf32>
    %80 = arith.mulf %77, %79 : vector<8x256xf32>
    %81 = arith.addf %76, %80 : vector<8x256xf32>
    %c224_i32_43 = arith.constant 224 : i32
    %82 = tpu.dynamic_rotate %52 by %c224_i32_43 dim 1 : vector<8x256xf32>, i32 -> vector<8x256xf32>
    %c15 = arith.constant 15 : index
    %c0_44 = arith.constant 0 : index
    %c0_45 = arith.constant 0 : index
    %83 = vector.load %arg2[%c15, %c0_44, %c0_45] : memref<36x8x256xf32, #tpu.memory_space<vmem>>, vector<1x8x256xf32>
    %84 = vector.shape_cast %83 : vector<1x8x256xf32> to vector<8x256xf32>
    %85 = arith.mulf %82, %84 : vector<8x256xf32>
    %86 = arith.addf %81, %85 : vector<8x256xf32>
    %c223_i32_46 = arith.constant 223 : i32
    %87 = tpu.dynamic_rotate %52 by %c223_i32_46 dim 1 : vector<8x256xf32>, i32 -> vector<8x256xf32>
    %c16 = arith.constant 16 : index
    %c0_47 = arith.constant 0 : index
    %c0_48 = arith.constant 0 : index
    %88 = vector.load %arg2[%c16, %c0_47, %c0_48] : memref<36x8x256xf32, #tpu.memory_space<vmem>>, vector<1x8x256xf32>
    %89 = vector.shape_cast %88 : vector<1x8x256xf32> to vector<8x256xf32>
    %90 = arith.mulf %87, %89 : vector<8x256xf32>
    %91 = arith.addf %86, %90 : vector<8x256xf32>
    %c222_i32_49 = arith.constant 222 : i32
    %92 = tpu.dynamic_rotate %52 by %c222_i32_49 dim 1 : vector<8x256xf32>, i32 -> vector<8x256xf32>
    %c17 = arith.constant 17 : index
    %c0_50 = arith.constant 0 : index
    %c0_51 = arith.constant 0 : index
    %93 = vector.load %arg2[%c17, %c0_50, %c0_51] : memref<36x8x256xf32, #tpu.memory_space<vmem>>, vector<1x8x256xf32>
    %94 = vector.shape_cast %93 : vector<1x8x256xf32> to vector<8x256xf32>
    %95 = arith.mulf %92, %94 : vector<8x256xf32>
    %96 = arith.addf %91, %95 : vector<8x256xf32>
    %c0_52 = arith.constant 0 : index
    %c2_53 = arith.constant 2 : index
    %c0_54 = arith.constant 0 : index
    %97 = vector.load %arg1[%c0_52, %c2_53, %c0_54] : memref<2x4x256xf32, #tpu.memory_space<vmem>>, vector<1x1x256xf32>
    %98 = vector.shape_cast %97 : vector<1x1x256xf32> to vector<1x256xf32>
    %99 = vector.shape_cast %98 : vector<1x256xf32> to vector<1x256xf32>
    %100 = vector.broadcast %99 : vector<1x256xf32> to vector<8x256xf32>
    %c18 = arith.constant 18 : index
    %c0_55 = arith.constant 0 : index
    %c0_56 = arith.constant 0 : index
    %101 = vector.load %arg2[%c18, %c0_55, %c0_56] : memref<36x8x256xf32, #tpu.memory_space<vmem>>, vector<1x8x256xf32>
    %102 = vector.shape_cast %101 : vector<1x8x256xf32> to vector<8x256xf32>
    %103 = arith.mulf %100, %102 : vector<8x256xf32>
    %104 = arith.addf %96, %103 : vector<8x256xf32>
    %c255_i32_57 = arith.constant 255 : i32
    %105 = tpu.dynamic_rotate %100 by %c255_i32_57 dim 1 : vector<8x256xf32>, i32 -> vector<8x256xf32>
    %c19 = arith.constant 19 : index
    %c0_58 = arith.constant 0 : index
    %c0_59 = arith.constant 0 : index
    %106 = vector.load %arg2[%c19, %c0_58, %c0_59] : memref<36x8x256xf32, #tpu.memory_space<vmem>>, vector<1x8x256xf32>
    %107 = vector.shape_cast %106 : vector<1x8x256xf32> to vector<8x256xf32>
    %108 = arith.mulf %105, %107 : vector<8x256xf32>
    %109 = arith.addf %104, %108 : vector<8x256xf32>
    %c254_i32_60 = arith.constant 254 : i32
    %110 = tpu.dynamic_rotate %100 by %c254_i32_60 dim 1 : vector<8x256xf32>, i32 -> vector<8x256xf32>
    %c20 = arith.constant 20 : index
    %c0_61 = arith.constant 0 : index
    %c0_62 = arith.constant 0 : index
    %111 = vector.load %arg2[%c20, %c0_61, %c0_62] : memref<36x8x256xf32, #tpu.memory_space<vmem>>, vector<1x8x256xf32>
    %112 = vector.shape_cast %111 : vector<1x8x256xf32> to vector<8x256xf32>
    %113 = arith.mulf %110, %112 : vector<8x256xf32>
    %114 = arith.addf %109, %113 : vector<8x256xf32>
    %c240_i32_63 = arith.constant 240 : i32
    %115 = tpu.dynamic_rotate %100 by %c240_i32_63 dim 1 : vector<8x256xf32>, i32 -> vector<8x256xf32>
    %c21 = arith.constant 21 : index
    %c0_64 = arith.constant 0 : index
    %c0_65 = arith.constant 0 : index
    %116 = vector.load %arg2[%c21, %c0_64, %c0_65] : memref<36x8x256xf32, #tpu.memory_space<vmem>>, vector<1x8x256xf32>
    %117 = vector.shape_cast %116 : vector<1x8x256xf32> to vector<8x256xf32>
    %118 = arith.mulf %115, %117 : vector<8x256xf32>
    %119 = arith.addf %114, %118 : vector<8x256xf32>
    %c239_i32_66 = arith.constant 239 : i32
    %120 = tpu.dynamic_rotate %100 by %c239_i32_66 dim 1 : vector<8x256xf32>, i32 -> vector<8x256xf32>
    %c22 = arith.constant 22 : index
    %c0_67 = arith.constant 0 : index
    %c0_68 = arith.constant 0 : index
    %121 = vector.load %arg2[%c22, %c0_67, %c0_68] : memref<36x8x256xf32, #tpu.memory_space<vmem>>, vector<1x8x256xf32>
    %122 = vector.shape_cast %121 : vector<1x8x256xf32> to vector<8x256xf32>
    %123 = arith.mulf %120, %122 : vector<8x256xf32>
    %124 = arith.addf %119, %123 : vector<8x256xf32>
    %c238_i32_69 = arith.constant 238 : i32
    %125 = tpu.dynamic_rotate %100 by %c238_i32_69 dim 1 : vector<8x256xf32>, i32 -> vector<8x256xf32>
    %c23 = arith.constant 23 : index
    %c0_70 = arith.constant 0 : index
    %c0_71 = arith.constant 0 : index
    %126 = vector.load %arg2[%c23, %c0_70, %c0_71] : memref<36x8x256xf32, #tpu.memory_space<vmem>>, vector<1x8x256xf32>
    %127 = vector.shape_cast %126 : vector<1x8x256xf32> to vector<8x256xf32>
    %128 = arith.mulf %125, %127 : vector<8x256xf32>
    %129 = arith.addf %124, %128 : vector<8x256xf32>
    %c224_i32_72 = arith.constant 224 : i32
    %130 = tpu.dynamic_rotate %100 by %c224_i32_72 dim 1 : vector<8x256xf32>, i32 -> vector<8x256xf32>
    %c24 = arith.constant 24 : index
    %c0_73 = arith.constant 0 : index
    %c0_74 = arith.constant 0 : index
    %131 = vector.load %arg2[%c24, %c0_73, %c0_74] : memref<36x8x256xf32, #tpu.memory_space<vmem>>, vector<1x8x256xf32>
    %132 = vector.shape_cast %131 : vector<1x8x256xf32> to vector<8x256xf32>
    %133 = arith.mulf %130, %132 : vector<8x256xf32>
    %134 = arith.addf %129, %133 : vector<8x256xf32>
    %c223_i32_75 = arith.constant 223 : i32
    %135 = tpu.dynamic_rotate %100 by %c223_i32_75 dim 1 : vector<8x256xf32>, i32 -> vector<8x256xf32>
    %c25 = arith.constant 25 : index
    %c0_76 = arith.constant 0 : index
    %c0_77 = arith.constant 0 : index
    %136 = vector.load %arg2[%c25, %c0_76, %c0_77] : memref<36x8x256xf32, #tpu.memory_space<vmem>>, vector<1x8x256xf32>
    %137 = vector.shape_cast %136 : vector<1x8x256xf32> to vector<8x256xf32>
    %138 = arith.mulf %135, %137 : vector<8x256xf32>
    %139 = arith.addf %134, %138 : vector<8x256xf32>
    %c222_i32_78 = arith.constant 222 : i32
    %140 = tpu.dynamic_rotate %100 by %c222_i32_78 dim 1 : vector<8x256xf32>, i32 -> vector<8x256xf32>
    %c26 = arith.constant 26 : index
    %c0_79 = arith.constant 0 : index
    %c0_80 = arith.constant 0 : index
    %141 = vector.load %arg2[%c26, %c0_79, %c0_80] : memref<36x8x256xf32, #tpu.memory_space<vmem>>, vector<1x8x256xf32>
    %142 = vector.shape_cast %141 : vector<1x8x256xf32> to vector<8x256xf32>
    %143 = arith.mulf %140, %142 : vector<8x256xf32>
    %144 = arith.addf %139, %143 : vector<8x256xf32>
    %c0_81 = arith.constant 0 : index
    %c3_82 = arith.constant 3 : index
    %c0_83 = arith.constant 0 : index
    %145 = vector.load %arg1[%c0_81, %c3_82, %c0_83] : memref<2x4x256xf32, #tpu.memory_space<vmem>>, vector<1x1x256xf32>
    %146 = vector.shape_cast %145 : vector<1x1x256xf32> to vector<1x256xf32>
    %147 = vector.shape_cast %146 : vector<1x256xf32> to vector<1x256xf32>
    %148 = vector.broadcast %147 : vector<1x256xf32> to vector<8x256xf32>
    %c27 = arith.constant 27 : index
    %c0_84 = arith.constant 0 : index
    %c0_85 = arith.constant 0 : index
    %149 = vector.load %arg2[%c27, %c0_84, %c0_85] : memref<36x8x256xf32, #tpu.memory_space<vmem>>, vector<1x8x256xf32>
    %150 = vector.shape_cast %149 : vector<1x8x256xf32> to vector<8x256xf32>
    %151 = arith.mulf %148, %150 : vector<8x256xf32>
    %152 = arith.addf %144, %151 : vector<8x256xf32>
    %c255_i32_86 = arith.constant 255 : i32
    %153 = tpu.dynamic_rotate %148 by %c255_i32_86 dim 1 : vector<8x256xf32>, i32 -> vector<8x256xf32>
    %c28 = arith.constant 28 : index
    %c0_87 = arith.constant 0 : index
    %c0_88 = arith.constant 0 : index
    %154 = vector.load %arg2[%c28, %c0_87, %c0_88] : memref<36x8x256xf32, #tpu.memory_space<vmem>>, vector<1x8x256xf32>
    %155 = vector.shape_cast %154 : vector<1x8x256xf32> to vector<8x256xf32>
    %156 = arith.mulf %153, %155 : vector<8x256xf32>
    %157 = arith.addf %152, %156 : vector<8x256xf32>
    %c254_i32_89 = arith.constant 254 : i32
    %158 = tpu.dynamic_rotate %148 by %c254_i32_89 dim 1 : vector<8x256xf32>, i32 -> vector<8x256xf32>
    %c29 = arith.constant 29 : index
    %c0_90 = arith.constant 0 : index
    %c0_91 = arith.constant 0 : index
    %159 = vector.load %arg2[%c29, %c0_90, %c0_91] : memref<36x8x256xf32, #tpu.memory_space<vmem>>, vector<1x8x256xf32>
    %160 = vector.shape_cast %159 : vector<1x8x256xf32> to vector<8x256xf32>
    %161 = arith.mulf %158, %160 : vector<8x256xf32>
    %162 = arith.addf %157, %161 : vector<8x256xf32>
    %c240_i32_92 = arith.constant 240 : i32
    %163 = tpu.dynamic_rotate %148 by %c240_i32_92 dim 1 : vector<8x256xf32>, i32 -> vector<8x256xf32>
    %c30 = arith.constant 30 : index
    %c0_93 = arith.constant 0 : index
    %c0_94 = arith.constant 0 : index
    %164 = vector.load %arg2[%c30, %c0_93, %c0_94] : memref<36x8x256xf32, #tpu.memory_space<vmem>>, vector<1x8x256xf32>
    %165 = vector.shape_cast %164 : vector<1x8x256xf32> to vector<8x256xf32>
    %166 = arith.mulf %163, %165 : vector<8x256xf32>
    %167 = arith.addf %162, %166 : vector<8x256xf32>
    %c239_i32_95 = arith.constant 239 : i32
    %168 = tpu.dynamic_rotate %148 by %c239_i32_95 dim 1 : vector<8x256xf32>, i32 -> vector<8x256xf32>
    %c31 = arith.constant 31 : index
    %c0_96 = arith.constant 0 : index
    %c0_97 = arith.constant 0 : index
    %169 = vector.load %arg2[%c31, %c0_96, %c0_97] : memref<36x8x256xf32, #tpu.memory_space<vmem>>, vector<1x8x256xf32>
    %170 = vector.shape_cast %169 : vector<1x8x256xf32> to vector<8x256xf32>
    %171 = arith.mulf %168, %170 : vector<8x256xf32>
    %172 = arith.addf %167, %171 : vector<8x256xf32>
    %c238_i32_98 = arith.constant 238 : i32
    %173 = tpu.dynamic_rotate %148 by %c238_i32_98 dim 1 : vector<8x256xf32>, i32 -> vector<8x256xf32>
    %c32 = arith.constant 32 : index
    %c0_99 = arith.constant 0 : index
    %c0_100 = arith.constant 0 : index
    %174 = vector.load %arg2[%c32, %c0_99, %c0_100] : memref<36x8x256xf32, #tpu.memory_space<vmem>>, vector<1x8x256xf32>
    %175 = vector.shape_cast %174 : vector<1x8x256xf32> to vector<8x256xf32>
    %176 = arith.mulf %173, %175 : vector<8x256xf32>
    %177 = arith.addf %172, %176 : vector<8x256xf32>
    %c224_i32_101 = arith.constant 224 : i32
    %178 = tpu.dynamic_rotate %148 by %c224_i32_101 dim 1 : vector<8x256xf32>, i32 -> vector<8x256xf32>
    %c33 = arith.constant 33 : index
    %c0_102 = arith.constant 0 : index
    %c0_103 = arith.constant 0 : index
    %179 = vector.load %arg2[%c33, %c0_102, %c0_103] : memref<36x8x256xf32, #tpu.memory_space<vmem>>, vector<1x8x256xf32>
    %180 = vector.shape_cast %179 : vector<1x8x256xf32> to vector<8x256xf32>
    %181 = arith.mulf %178, %180 : vector<8x256xf32>
    %182 = arith.addf %177, %181 : vector<8x256xf32>
    %c223_i32_104 = arith.constant 223 : i32
    %183 = tpu.dynamic_rotate %148 by %c223_i32_104 dim 1 : vector<8x256xf32>, i32 -> vector<8x256xf32>
    %c34 = arith.constant 34 : index
    %c0_105 = arith.constant 0 : index
    %c0_106 = arith.constant 0 : index
    %184 = vector.load %arg2[%c34, %c0_105, %c0_106] : memref<36x8x256xf32, #tpu.memory_space<vmem>>, vector<1x8x256xf32>
    %185 = vector.shape_cast %184 : vector<1x8x256xf32> to vector<8x256xf32>
    %186 = arith.mulf %183, %185 : vector<8x256xf32>
    %187 = arith.addf %182, %186 : vector<8x256xf32>
    %c222_i32_107 = arith.constant 222 : i32
    %188 = tpu.dynamic_rotate %148 by %c222_i32_107 dim 1 : vector<8x256xf32>, i32 -> vector<8x256xf32>
    %c35 = arith.constant 35 : index
    %c0_108 = arith.constant 0 : index
    %c0_109 = arith.constant 0 : index
    %189 = vector.load %arg2[%c35, %c0_108, %c0_109] : memref<36x8x256xf32, #tpu.memory_space<vmem>>, vector<1x8x256xf32>
    %190 = vector.shape_cast %189 : vector<1x8x256xf32> to vector<8x256xf32>
    %191 = arith.mulf %188, %190 : vector<8x256xf32>
    %192 = arith.addf %187, %191 : vector<8x256xf32>
    %c0_110 = arith.constant 0 : index
    %c0_111 = arith.constant 0 : index
    %c0_112 = arith.constant 0 : index
    %193 = vector.load %arg4[%c0_110, %c0_111, %c0_112] : memref<2x8x256xf32, #tpu.memory_space<vmem>>, vector<1x8x256xf32>
    %194 = vector.shape_cast %193 : vector<1x8x256xf32> to vector<8x256xf32>
    %195 = vector.shape_cast %192 : vector<8x256xf32> to vector<1x8x256xf32>
    tpu.vector_store %arg4[%c0_110, %c0_111, %c0_112], %195 {strides = array<i32>} : memref<2x8x256xf32, #tpu.memory_space<vmem>>, vector<1x8x256xf32>,
    %c1_113 = arith.constant 1 : index
    %c0_114 = arith.constant 0 : index
    %c0_115 = arith.constant 0 : index
    %196 = vector.load %arg1[%c1_113, %c0_114, %c0_115] : memref<2x4x256xf32, #tpu.memory_space<vmem>>, vector<1x1x256xf32>
    %197 = vector.shape_cast %196 : vector<1x1x256xf32> to vector<1x256xf32>
    %198 = vector.shape_cast %197 : vector<1x256xf32> to vector<1x256xf32>
    %199 = vector.broadcast %198 : vector<1x256xf32> to vector<8x256xf32>
    %c0_116 = arith.constant 0 : index
    %c0_117 = arith.constant 0 : index
    %c0_118 = arith.constant 0 : index
    %200 = vector.load %arg2[%c0_116, %c0_117, %c0_118] : memref<36x8x256xf32, #tpu.memory_space<vmem>>, vector<1x8x256xf32>
    %201 = vector.shape_cast %200 : vector<1x8x256xf32> to vector<8x256xf32>
    %202 = arith.mulf %199, %201 : vector<8x256xf32>
    %203 = arith.addf %0, %202 : vector<8x256xf32>
    %c255_i32_119 = arith.constant 255 : i32
    %204 = tpu.dynamic_rotate %199 by %c255_i32_119 dim 1 : vector<8x256xf32>, i32 -> vector<8x256xf32>
    %c1_120 = arith.constant 1 : index
    %c0_121 = arith.constant 0 : index
    %c0_122 = arith.constant 0 : index
    %205 = vector.load %arg2[%c1_120, %c0_121, %c0_122] : memref<36x8x256xf32, #tpu.memory_space<vmem>>, vector<1x8x256xf32>
    %206 = vector.shape_cast %205 : vector<1x8x256xf32> to vector<8x256xf32>
    %207 = arith.mulf %204, %206 : vector<8x256xf32>
    %208 = arith.addf %203, %207 : vector<8x256xf32>
    %c254_i32_123 = arith.constant 254 : i32
    %209 = tpu.dynamic_rotate %199 by %c254_i32_123 dim 1 : vector<8x256xf32>, i32 -> vector<8x256xf32>
    %c2_124 = arith.constant 2 : index
    %c0_125 = arith.constant 0 : index
    %c0_126 = arith.constant 0 : index
    %210 = vector.load %arg2[%c2_124, %c0_125, %c0_126] : memref<36x8x256xf32, #tpu.memory_space<vmem>>, vector<1x8x256xf32>
    %211 = vector.shape_cast %210 : vector<1x8x256xf32> to vector<8x256xf32>
    %212 = arith.mulf %209, %211 : vector<8x256xf32>
    %213 = arith.addf %208, %212 : vector<8x256xf32>
    %c240_i32_127 = arith.constant 240 : i32
    %214 = tpu.dynamic_rotate %199 by %c240_i32_127 dim 1 : vector<8x256xf32>, i32 -> vector<8x256xf32>
    %c3_128 = arith.constant 3 : index
    %c0_129 = arith.constant 0 : index
    %c0_130 = arith.constant 0 : index
    %215 = vector.load %arg2[%c3_128, %c0_129, %c0_130] : memref<36x8x256xf32, #tpu.memory_space<vmem>>, vector<1x8x256xf32>
    %216 = vector.shape_cast %215 : vector<1x8x256xf32> to vector<8x256xf32>
    %217 = arith.mulf %214, %216 : vector<8x256xf32>
    %218 = arith.addf %213, %217 : vector<8x256xf32>
    %c239_i32_131 = arith.constant 239 : i32
    %219 = tpu.dynamic_rotate %199 by %c239_i32_131 dim 1 : vector<8x256xf32>, i32 -> vector<8x256xf32>
    %c4_132 = arith.constant 4 : index
    %c0_133 = arith.constant 0 : index
    %c0_134 = arith.constant 0 : index
    %220 = vector.load %arg2[%c4_132, %c0_133, %c0_134] : memref<36x8x256xf32, #tpu.memory_space<vmem>>, vector<1x8x256xf32>
    %221 = vector.shape_cast %220 : vector<1x8x256xf32> to vector<8x256xf32>
    %222 = arith.mulf %219, %221 : vector<8x256xf32>
    %223 = arith.addf %218, %222 : vector<8x256xf32>
    %c238_i32_135 = arith.constant 238 : i32
    %224 = tpu.dynamic_rotate %199 by %c238_i32_135 dim 1 : vector<8x256xf32>, i32 -> vector<8x256xf32>
    %c5_136 = arith.constant 5 : index
    %c0_137 = arith.constant 0 : index
    %c0_138 = arith.constant 0 : index
    %225 = vector.load %arg2[%c5_136, %c0_137, %c0_138] : memref<36x8x256xf32, #tpu.memory_space<vmem>>, vector<1x8x256xf32>
    %226 = vector.shape_cast %225 : vector<1x8x256xf32> to vector<8x256xf32>
    %227 = arith.mulf %224, %226 : vector<8x256xf32>
    %228 = arith.addf %223, %227 : vector<8x256xf32>
    %c224_i32_139 = arith.constant 224 : i32
    %229 = tpu.dynamic_rotate %199 by %c224_i32_139 dim 1 : vector<8x256xf32>, i32 -> vector<8x256xf32>
    %c6_140 = arith.constant 6 : index
    %c0_141 = arith.constant 0 : index
    %c0_142 = arith.constant 0 : index
    %230 = vector.load %arg2[%c6_140, %c0_141, %c0_142] : memref<36x8x256xf32, #tpu.memory_space<vmem>>, vector<1x8x256xf32>
    %231 = vector.shape_cast %230 : vector<1x8x256xf32> to vector<8x256xf32>
    %232 = arith.mulf %229, %231 : vector<8x256xf32>
    %233 = arith.addf %228, %232 : vector<8x256xf32>
    %c223_i32_143 = arith.constant 223 : i32
    %234 = tpu.dynamic_rotate %199 by %c223_i32_143 dim 1 : vector<8x256xf32>, i32 -> vector<8x256xf32>
    %c7_144 = arith.constant 7 : index
    %c0_145 = arith.constant 0 : index
    %c0_146 = arith.constant 0 : index
    %235 = vector.load %arg2[%c7_144, %c0_145, %c0_146] : memref<36x8x256xf32, #tpu.memory_space<vmem>>, vector<1x8x256xf32>
    %236 = vector.shape_cast %235 : vector<1x8x256xf32> to vector<8x256xf32>
    %237 = arith.mulf %234, %236 : vector<8x256xf32>
    %238 = arith.addf %233, %237 : vector<8x256xf32>
    %c222_i32_147 = arith.constant 222 : i32
    %239 = tpu.dynamic_rotate %199 by %c222_i32_147 dim 1 : vector<8x256xf32>, i32 -> vector<8x256xf32>
    %c8_148 = arith.constant 8 : index
    %c0_149 = arith.constant 0 : index
    %c0_150 = arith.constant 0 : index
    %240 = vector.load %arg2[%c8_148, %c0_149, %c0_150] : memref<36x8x256xf32, #tpu.memory_space<vmem>>, vector<1x8x256xf32>
    %241 = vector.shape_cast %240 : vector<1x8x256xf32> to vector<8x256xf32>
    %242 = arith.mulf %239, %241 : vector<8x256xf32>
    %243 = arith.addf %238, %242 : vector<8x256xf32>
    %c1_151 = arith.constant 1 : index
    %c1_152 = arith.constant 1 : index
    %c0_153 = arith.constant 0 : index
    %244 = vector.load %arg1[%c1_151, %c1_152, %c0_153] : memref<2x4x256xf32, #tpu.memory_space<vmem>>, vector<1x1x256xf32>
    %245 = vector.shape_cast %244 : vector<1x1x256xf32> to vector<1x256xf32>
    %246 = vector.shape_cast %245 : vector<1x256xf32> to vector<1x256xf32>
    %247 = vector.broadcast %246 : vector<1x256xf32> to vector<8x256xf32>
    %c9_154 = arith.constant 9 : index
    %c0_155 = arith.constant 0 : index
    %c0_156 = arith.constant 0 : index
    %248 = vector.load %arg2[%c9_154, %c0_155, %c0_156] : memref<36x8x256xf32, #tpu.memory_space<vmem>>, vector<1x8x256xf32>
    %249 = vector.shape_cast %248 : vector<1x8x256xf32> to vector<8x256xf32>
    %250 = arith.mulf %247, %249 : vector<8x256xf32>
    %251 = arith.addf %243, %250 : vector<8x256xf32>
    %c255_i32_157 = arith.constant 255 : i32
    %252 = tpu.dynamic_rotate %247 by %c255_i32_157 dim 1 : vector<8x256xf32>, i32 -> vector<8x256xf32>
    %c10_158 = arith.constant 10 : index
    %c0_159 = arith.constant 0 : index
    %c0_160 = arith.constant 0 : index
    %253 = vector.load %arg2[%c10_158, %c0_159, %c0_160] : memref<36x8x256xf32, #tpu.memory_space<vmem>>, vector<1x8x256xf32>
    %254 = vector.shape_cast %253 : vector<1x8x256xf32> to vector<8x256xf32>
    %255 = arith.mulf %252, %254 : vector<8x256xf32>
    %256 = arith.addf %251, %255 : vector<8x256xf32>
    %c254_i32_161 = arith.constant 254 : i32
    %257 = tpu.dynamic_rotate %247 by %c254_i32_161 dim 1 : vector<8x256xf32>, i32 -> vector<8x256xf32>
    %c11_162 = arith.constant 11 : index
    %c0_163 = arith.constant 0 : index
    %c0_164 = arith.constant 0 : index
    %258 = vector.load %arg2[%c11_162, %c0_163, %c0_164] : memref<36x8x256xf32, #tpu.memory_space<vmem>>, vector<1x8x256xf32>
    %259 = vector.shape_cast %258 : vector<1x8x256xf32> to vector<8x256xf32>
    %260 = arith.mulf %257, %259 : vector<8x256xf32>
    %261 = arith.addf %256, %260 : vector<8x256xf32>
    %c240_i32_165 = arith.constant 240 : i32
    %262 = tpu.dynamic_rotate %247 by %c240_i32_165 dim 1 : vector<8x256xf32>, i32 -> vector<8x256xf32>
    %c12_166 = arith.constant 12 : index
    %c0_167 = arith.constant 0 : index
    %c0_168 = arith.constant 0 : index
    %263 = vector.load %arg2[%c12_166, %c0_167, %c0_168] : memref<36x8x256xf32, #tpu.memory_space<vmem>>, vector<1x8x256xf32>
    %264 = vector.shape_cast %263 : vector<1x8x256xf32> to vector<8x256xf32>
    %265 = arith.mulf %262, %264 : vector<8x256xf32>
    %266 = arith.addf %261, %265 : vector<8x256xf32>
    %c239_i32_169 = arith.constant 239 : i32
    %267 = tpu.dynamic_rotate %247 by %c239_i32_169 dim 1 : vector<8x256xf32>, i32 -> vector<8x256xf32>
    %c13_170 = arith.constant 13 : index
    %c0_171 = arith.constant 0 : index
    %c0_172 = arith.constant 0 : index
    %268 = vector.load %arg2[%c13_170, %c0_171, %c0_172] : memref<36x8x256xf32, #tpu.memory_space<vmem>>, vector<1x8x256xf32>
    %269 = vector.shape_cast %268 : vector<1x8x256xf32> to vector<8x256xf32>
    %270 = arith.mulf %267, %269 : vector<8x256xf32>
    %271 = arith.addf %266, %270 : vector<8x256xf32>
    %c238_i32_173 = arith.constant 238 : i32
    %272 = tpu.dynamic_rotate %247 by %c238_i32_173 dim 1 : vector<8x256xf32>, i32 -> vector<8x256xf32>
    %c14_174 = arith.constant 14 : index
    %c0_175 = arith.constant 0 : index
    %c0_176 = arith.constant 0 : index
    %273 = vector.load %arg2[%c14_174, %c0_175, %c0_176] : memref<36x8x256xf32, #tpu.memory_space<vmem>>, vector<1x8x256xf32>
    %274 = vector.shape_cast %273 : vector<1x8x256xf32> to vector<8x256xf32>
    %275 = arith.mulf %272, %274 : vector<8x256xf32>
    %276 = arith.addf %271, %275 : vector<8x256xf32>
    %c224_i32_177 = arith.constant 224 : i32
    %277 = tpu.dynamic_rotate %247 by %c224_i32_177 dim 1 : vector<8x256xf32>, i32 -> vector<8x256xf32>
    %c15_178 = arith.constant 15 : index
    %c0_179 = arith.constant 0 : index
    %c0_180 = arith.constant 0 : index
    %278 = vector.load %arg2[%c15_178, %c0_179, %c0_180] : memref<36x8x256xf32, #tpu.memory_space<vmem>>, vector<1x8x256xf32>
    %279 = vector.shape_cast %278 : vector<1x8x256xf32> to vector<8x256xf32>
    %280 = arith.mulf %277, %279 : vector<8x256xf32>
    %281 = arith.addf %276, %280 : vector<8x256xf32>
    %c223_i32_181 = arith.constant 223 : i32
    %282 = tpu.dynamic_rotate %247 by %c223_i32_181 dim 1 : vector<8x256xf32>, i32 -> vector<8x256xf32>
    %c16_182 = arith.constant 16 : index
    %c0_183 = arith.constant 0 : index
    %c0_184 = arith.constant 0 : index
    %283 = vector.load %arg2[%c16_182, %c0_183, %c0_184] : memref<36x8x256xf32, #tpu.memory_space<vmem>>, vector<1x8x256xf32>
    %284 = vector.shape_cast %283 : vector<1x8x256xf32> to vector<8x256xf32>
    %285 = arith.mulf %282, %284 : vector<8x256xf32>
    %286 = arith.addf %281, %285 : vector<8x256xf32>
    %c222_i32_185 = arith.constant 222 : i32
    %287 = tpu.dynamic_rotate %247 by %c222_i32_185 dim 1 : vector<8x256xf32>, i32 -> vector<8x256xf32>
    %c17_186 = arith.constant 17 : index
    %c0_187 = arith.constant 0 : index
    %c0_188 = arith.constant 0 : index
    %288 = vector.load %arg2[%c17_186, %c0_187, %c0_188] : memref<36x8x256xf32, #tpu.memory_space<vmem>>, vector<1x8x256xf32>
    %289 = vector.shape_cast %288 : vector<1x8x256xf32> to vector<8x256xf32>
    %290 = arith.mulf %287, %289 : vector<8x256xf32>
    %291 = arith.addf %286, %290 : vector<8x256xf32>
    %c1_189 = arith.constant 1 : index
    %c2_190 = arith.constant 2 : index
    %c0_191 = arith.constant 0 : index
    %292 = vector.load %arg1[%c1_189, %c2_190, %c0_191] : memref<2x4x256xf32, #tpu.memory_space<vmem>>, vector<1x1x256xf32>
    %293 = vector.shape_cast %292 : vector<1x1x256xf32> to vector<1x256xf32>
    %294 = vector.shape_cast %293 : vector<1x256xf32> to vector<1x256xf32>
    %295 = vector.broadcast %294 : vector<1x256xf32> to vector<8x256xf32>
    %c18_192 = arith.constant 18 : index
    %c0_193 = arith.constant 0 : index
    %c0_194 = arith.constant 0 : index
    %296 = vector.load %arg2[%c18_192, %c0_193, %c0_194] : memref<36x8x256xf32, #tpu.memory_space<vmem>>, vector<1x8x256xf32>
    %297 = vector.shape_cast %296 : vector<1x8x256xf32> to vector<8x256xf32>
    %298 = arith.mulf %295, %297 : vector<8x256xf32>
    %299 = arith.addf %291, %298 : vector<8x256xf32>
    %c255_i32_195 = arith.constant 255 : i32
    %300 = tpu.dynamic_rotate %295 by %c255_i32_195 dim 1 : vector<8x256xf32>, i32 -> vector<8x256xf32>
    %c19_196 = arith.constant 19 : index
    %c0_197 = arith.constant 0 : index
    %c0_198 = arith.constant 0 : index
    %301 = vector.load %arg2[%c19_196, %c0_197, %c0_198] : memref<36x8x256xf32, #tpu.memory_space<vmem>>, vector<1x8x256xf32>
    %302 = vector.shape_cast %301 : vector<1x8x256xf32> to vector<8x256xf32>
    %303 = arith.mulf %300, %302 : vector<8x256xf32>
    %304 = arith.addf %299, %303 : vector<8x256xf32>
    %c254_i32_199 = arith.constant 254 : i32
    %305 = tpu.dynamic_rotate %295 by %c254_i32_199 dim 1 : vector<8x256xf32>, i32 -> vector<8x256xf32>
    %c20_200 = arith.constant 20 : index
    %c0_201 = arith.constant 0 : index
    %c0_202 = arith.constant 0 : index
    %306 = vector.load %arg2[%c20_200, %c0_201, %c0_202] : memref<36x8x256xf32, #tpu.memory_space<vmem>>, vector<1x8x256xf32>
    %307 = vector.shape_cast %306 : vector<1x8x256xf32> to vector<8x256xf32>
    %308 = arith.mulf %305, %307 : vector<8x256xf32>
    %309 = arith.addf %304, %308 : vector<8x256xf32>
    %c240_i32_203 = arith.constant 240 : i32
    %310 = tpu.dynamic_rotate %295 by %c240_i32_203 dim 1 : vector<8x256xf32>, i32 -> vector<8x256xf32>
    %c21_204 = arith.constant 21 : index
    %c0_205 = arith.constant 0 : index
    %c0_206 = arith.constant 0 : index
    %311 = vector.load %arg2[%c21_204, %c0_205, %c0_206] : memref<36x8x256xf32, #tpu.memory_space<vmem>>, vector<1x8x256xf32>
    %312 = vector.shape_cast %311 : vector<1x8x256xf32> to vector<8x256xf32>
    %313 = arith.mulf %310, %312 : vector<8x256xf32>
    %314 = arith.addf %309, %313 : vector<8x256xf32>
    %c239_i32_207 = arith.constant 239 : i32
    %315 = tpu.dynamic_rotate %295 by %c239_i32_207 dim 1 : vector<8x256xf32>, i32 -> vector<8x256xf32>
    %c22_208 = arith.constant 22 : index
    %c0_209 = arith.constant 0 : index
    %c0_210 = arith.constant 0 : index
    %316 = vector.load %arg2[%c22_208, %c0_209, %c0_210] : memref<36x8x256xf32, #tpu.memory_space<vmem>>, vector<1x8x256xf32>
    %317 = vector.shape_cast %316 : vector<1x8x256xf32> to vector<8x256xf32>
    %318 = arith.mulf %315, %317 : vector<8x256xf32>
    %319 = arith.addf %314, %318 : vector<8x256xf32>
    %c238_i32_211 = arith.constant 238 : i32
    %320 = tpu.dynamic_rotate %295 by %c238_i32_211 dim 1 : vector<8x256xf32>, i32 -> vector<8x256xf32>
    %c23_212 = arith.constant 23 : index
    %c0_213 = arith.constant 0 : index
    %c0_214 = arith.constant 0 : index
    %321 = vector.load %arg2[%c23_212, %c0_213, %c0_214] : memref<36x8x256xf32, #tpu.memory_space<vmem>>, vector<1x8x256xf32>
    %322 = vector.shape_cast %321 : vector<1x8x256xf32> to vector<8x256xf32>
    %323 = arith.mulf %320, %322 : vector<8x256xf32>
    %324 = arith.addf %319, %323 : vector<8x256xf32>
    %c224_i32_215 = arith.constant 224 : i32
    %325 = tpu.dynamic_rotate %295 by %c224_i32_215 dim 1 : vector<8x256xf32>, i32 -> vector<8x256xf32>
    %c24_216 = arith.constant 24 : index
    %c0_217 = arith.constant 0 : index
    %c0_218 = arith.constant 0 : index
    %326 = vector.load %arg2[%c24_216, %c0_217, %c0_218] : memref<36x8x256xf32, #tpu.memory_space<vmem>>, vector<1x8x256xf32>
    %327 = vector.shape_cast %326 : vector<1x8x256xf32> to vector<8x256xf32>
    %328 = arith.mulf %325, %327 : vector<8x256xf32>
    %329 = arith.addf %324, %328 : vector<8x256xf32>
    %c223_i32_219 = arith.constant 223 : i32
    %330 = tpu.dynamic_rotate %295 by %c223_i32_219 dim 1 : vector<8x256xf32>, i32 -> vector<8x256xf32>
    %c25_220 = arith.constant 25 : index
    %c0_221 = arith.constant 0 : index
    %c0_222 = arith.constant 0 : index
    %331 = vector.load %arg2[%c25_220, %c0_221, %c0_222] : memref<36x8x256xf32, #tpu.memory_space<vmem>>, vector<1x8x256xf32>
    %332 = vector.shape_cast %331 : vector<1x8x256xf32> to vector<8x256xf32>
    %333 = arith.mulf %330, %332 : vector<8x256xf32>
    %334 = arith.addf %329, %333 : vector<8x256xf32>
    %c222_i32_223 = arith.constant 222 : i32
    %335 = tpu.dynamic_rotate %295 by %c222_i32_223 dim 1 : vector<8x256xf32>, i32 -> vector<8x256xf32>
    %c26_224 = arith.constant 26 : index
    %c0_225 = arith.constant 0 : index
    %c0_226 = arith.constant 0 : index
    %336 = vector.load %arg2[%c26_224, %c0_225, %c0_226] : memref<36x8x256xf32, #tpu.memory_space<vmem>>, vector<1x8x256xf32>
    %337 = vector.shape_cast %336 : vector<1x8x256xf32> to vector<8x256xf32>
    %338 = arith.mulf %335, %337 : vector<8x256xf32>
    %339 = arith.addf %334, %338 : vector<8x256xf32>
    %c1_227 = arith.constant 1 : index
    %c3_228 = arith.constant 3 : index
    %c0_229 = arith.constant 0 : index
    %340 = vector.load %arg1[%c1_227, %c3_228, %c0_229] : memref<2x4x256xf32, #tpu.memory_space<vmem>>, vector<1x1x256xf32>
    %341 = vector.shape_cast %340 : vector<1x1x256xf32> to vector<1x256xf32>
    %342 = vector.shape_cast %341 : vector<1x256xf32> to vector<1x256xf32>
    %343 = vector.broadcast %342 : vector<1x256xf32> to vector<8x256xf32>
    %c27_230 = arith.constant 27 : index
    %c0_231 = arith.constant 0 : index
    %c0_232 = arith.constant 0 : index
    %344 = vector.load %arg2[%c27_230, %c0_231, %c0_232] : memref<36x8x256xf32, #tpu.memory_space<vmem>>, vector<1x8x256xf32>
    %345 = vector.shape_cast %344 : vector<1x8x256xf32> to vector<8x256xf32>
    %346 = arith.mulf %343, %345 : vector<8x256xf32>
    %347 = arith.addf %339, %346 : vector<8x256xf32>
    %c255_i32_233 = arith.constant 255 : i32
    %348 = tpu.dynamic_rotate %343 by %c255_i32_233 dim 1 : vector<8x256xf32>, i32 -> vector<8x256xf32>
    %c28_234 = arith.constant 28 : index
    %c0_235 = arith.constant 0 : index
    %c0_236 = arith.constant 0 : index
    %349 = vector.load %arg2[%c28_234, %c0_235, %c0_236] : memref<36x8x256xf32, #tpu.memory_space<vmem>>, vector<1x8x256xf32>
    %350 = vector.shape_cast %349 : vector<1x8x256xf32> to vector<8x256xf32>
    %351 = arith.mulf %348, %350 : vector<8x256xf32>
    %352 = arith.addf %347, %351 : vector<8x256xf32>
    %c254_i32_237 = arith.constant 254 : i32
    %353 = tpu.dynamic_rotate %343 by %c254_i32_237 dim 1 : vector<8x256xf32>, i32 -> vector<8x256xf32>
    %c29_238 = arith.constant 29 : index
    %c0_239 = arith.constant 0 : index
    %c0_240 = arith.constant 0 : index
    %354 = vector.load %arg2[%c29_238, %c0_239, %c0_240] : memref<36x8x256xf32, #tpu.memory_space<vmem>>, vector<1x8x256xf32>
    %355 = vector.shape_cast %354 : vector<1x8x256xf32> to vector<8x256xf32>
    %356 = arith.mulf %353, %355 : vector<8x256xf32>
    %357 = arith.addf %352, %356 : vector<8x256xf32>
    %c240_i32_241 = arith.constant 240 : i32
    %358 = tpu.dynamic_rotate %343 by %c240_i32_241 dim 1 : vector<8x256xf32>, i32 -> vector<8x256xf32>
    %c30_242 = arith.constant 30 : index
    %c0_243 = arith.constant 0 : index
    %c0_244 = arith.constant 0 : index
    %359 = vector.load %arg2[%c30_242, %c0_243, %c0_244] : memref<36x8x256xf32, #tpu.memory_space<vmem>>, vector<1x8x256xf32>
    %360 = vector.shape_cast %359 : vector<1x8x256xf32> to vector<8x256xf32>
    %361 = arith.mulf %358, %360 : vector<8x256xf32>
    %362 = arith.addf %357, %361 : vector<8x256xf32>
    %c239_i32_245 = arith.constant 239 : i32
    %363 = tpu.dynamic_rotate %343 by %c239_i32_245 dim 1 : vector<8x256xf32>, i32 -> vector<8x256xf32>
    %c31_246 = arith.constant 31 : index
    %c0_247 = arith.constant 0 : index
    %c0_248 = arith.constant 0 : index
    %364 = vector.load %arg2[%c31_246, %c0_247, %c0_248] : memref<36x8x256xf32, #tpu.memory_space<vmem>>, vector<1x8x256xf32>
    %365 = vector.shape_cast %364 : vector<1x8x256xf32> to vector<8x256xf32>
    %366 = arith.mulf %363, %365 : vector<8x256xf32>
    %367 = arith.addf %362, %366 : vector<8x256xf32>
    %c238_i32_249 = arith.constant 238 : i32
    %368 = tpu.dynamic_rotate %343 by %c238_i32_249 dim 1 : vector<8x256xf32>, i32 -> vector<8x256xf32>
    %c32_250 = arith.constant 32 : index
    %c0_251 = arith.constant 0 : index
    %c0_252 = arith.constant 0 : index
    %369 = vector.load %arg2[%c32_250, %c0_251, %c0_252] : memref<36x8x256xf32, #tpu.memory_space<vmem>>, vector<1x8x256xf32>
    %370 = vector.shape_cast %369 : vector<1x8x256xf32> to vector<8x256xf32>
    %371 = arith.mulf %368, %370 : vector<8x256xf32>
    %372 = arith.addf %367, %371 : vector<8x256xf32>
    %c224_i32_253 = arith.constant 224 : i32
    %373 = tpu.dynamic_rotate %343 by %c224_i32_253 dim 1 : vector<8x256xf32>, i32 -> vector<8x256xf32>
    %c33_254 = arith.constant 33 : index
    %c0_255 = arith.constant 0 : index
    %c0_256 = arith.constant 0 : index
    %374 = vector.load %arg2[%c33_254, %c0_255, %c0_256] : memref<36x8x256xf32, #tpu.memory_space<vmem>>, vector<1x8x256xf32>
    %375 = vector.shape_cast %374 : vector<1x8x256xf32> to vector<8x256xf32>
    %376 = arith.mulf %373, %375 : vector<8x256xf32>
    %377 = arith.addf %372, %376 : vector<8x256xf32>
    %c223_i32_257 = arith.constant 223 : i32
    %378 = tpu.dynamic_rotate %343 by %c223_i32_257 dim 1 : vector<8x256xf32>, i32 -> vector<8x256xf32>
    %c34_258 = arith.constant 34 : index
    %c0_259 = arith.constant 0 : index
    %c0_260 = arith.constant 0 : index
    %379 = vector.load %arg2[%c34_258, %c0_259, %c0_260] : memref<36x8x256xf32, #tpu.memory_space<vmem>>, vector<1x8x256xf32>
    %380 = vector.shape_cast %379 : vector<1x8x256xf32> to vector<8x256xf32>
    %381 = arith.mulf %378, %380 : vector<8x256xf32>
    %382 = arith.addf %377, %381 : vector<8x256xf32>
    %c222_i32_261 = arith.constant 222 : i32
    %383 = tpu.dynamic_rotate %343 by %c222_i32_261 dim 1 : vector<8x256xf32>, i32 -> vector<8x256xf32>
    %c35_262 = arith.constant 35 : index
    %c0_263 = arith.constant 0 : index
    %c0_264 = arith.constant 0 : index
    %384 = vector.load %arg2[%c35_262, %c0_263, %c0_264] : memref<36x8x256xf32, #tpu.memory_space<vmem>>, vector<1x8x256xf32>
    %385 = vector.shape_cast %384 : vector<1x8x256xf32> to vector<8x256xf32>
    %386 = arith.mulf %383, %385 : vector<8x256xf32>
    %387 = arith.addf %382, %386 : vector<8x256xf32>
    %c1_265 = arith.constant 1 : index
    %c0_266 = arith.constant 0 : index
    %c0_267 = arith.constant 0 : index
    %388 = vector.load %arg4[%c1_265, %c0_266, %c0_267] : memref<2x8x256xf32, #tpu.memory_space<vmem>>, vector<1x8x256xf32>
    %389 = vector.shape_cast %388 : vector<1x8x256xf32> to vector<8x256xf32>
    %390 = vector.shape_cast %387 : vector<8x256xf32> to vector<1x8x256xf32>
    tpu.vector_store %arg4[%c1_265, %c0_266, %c0_267], %390 {strides = array<i32>} : memref<2x8x256xf32, #tpu.memory_space<vmem>>, vector<1x8x256xf32>,
    return
  }
  func.func @transform_0(%arg0: i32) -> (i32, i32, i32) {
    %c0_i32 = arith.constant 0 : i32
    %c0_i32_0 = arith.constant 0 : i32
    %c0_i32_1 = arith.constant 0 : i32
    %c0_i32_2 = arith.constant 0 : i32
    return %c0_i32, %c0_i32_0, %c0_i32_1 : i32, i32, i32
  }
  func.func @transform_1(%arg0: i32) -> (i32, i32, i32) {
    %c0_i32 = arith.constant 0 : i32
    %c0_i32_0 = arith.constant 0 : i32
    %c0_i32_1 = arith.constant 0 : i32
    %c0_i32_2 = arith.constant 0 : i32
    return %c0_i32, %c0_i32_0, %c0_i32_1 : i32, i32, i32
  }
  func.func @transform_2(%arg0: i32) -> (i32, i32) {
    %c0_i32 = arith.constant 0 : i32
    %c0_i32_0 = arith.constant 0 : i32
    %c0_i32_1 = arith.constant 0 : i32
    return %c0_i32, %c0_i32_0 : i32, i32
  }
  func.func @transform_3(%arg0: i32) -> (i32, i32, i32) {
    %c0_i32 = arith.constant 0 : i32
    %c0_i32_0 = arith.constant 0 : i32
    %c0_i32_1 = arith.constant 0 : i32
    %c0_i32_2 = arith.constant 0 : i32
    return %c0_i32, %c0_i32_0, %c0_i32_1 : i32, i32, i32
  }
}

</mosaic_0001>

<llo_original>
// kernel: locally_connected_2d.1
$region0: #{locally_connected_2d.1}
  #allocation0 [shape = 'u32[]', space=smem, size = 0x4, offset = 0x4, fixed_abs, tag = 'smem constant byte address 0x4 - core index']
  #allocation1 [shape = 'u32[72,128]{1,0:T(1,128)}', space=vmem, size = 0x9000, scoped, tag = 'internal scratch']
  %s0 = inlined_call_operand.vmem [shape: f32[2,4,256], index: 0, kind: input, shape index: {}]
  %s1 = inlined_call_operand.hbm [shape: f32[36,8,256], index: 1, kind: input, shape index: {}]
  %s2 = inlined_call_operand.vmem [shape: f32[8,256], index: 2, kind: input, shape index: {}]
  %s3 = inlined_call_operand.vmem [shape: f32[2,8,256], index: 3, kind: output, shape index: {}]
  %s4 = sld [smem:[#allocation0]]
  $region26: #{locally_connected_2d.1} parent=0
    _
  %s6 = ssub.s32 1, %s4
  %s7 = scalar_select 0, %s6, %s4
  $region1: #{locally_connected_2d.1} parent=0
    #allocation2 [shape = 'u8[294912]{0}', space=vmem, size = 0x48000, scoped, tag = 'input window, operand 1, single buffered']
    #allocation3 [shape = 's32[1]{0}', space=sflag, size = 0x4, scoped, tag = 'scoped memory for locally_connected_2d.1']
    %8 = vsyncpa [#allocation3], 0
    // Predicated region
    $region2: #{locally_connected_2d.1} parent=1 // pred_check
      _
    $region3: #{locally_connected_2d.1} parent=1 // pred_check_branch
      %10 = sbr.rel (0) target = $region5
    $region4: #{locally_connected_2d.1} parent=1 // pred_region
      _
    $region5: #{locally_connected_2d.1} parent=1 // pred_fallthru
      _
    // Predicated region
    $region6: #{locally_connected_2d.1} parent=1 // pred_check
      _
    $region7: #{locally_connected_2d.1} parent=1 // pred_check_branch
      %12 = sbr.rel (0) target = $region9
    $region8: #{locally_connected_2d.1} parent=1 // pred_region
      %14 = vsyncadd [#allocation3], 0
      %s15 = sshll.u32 %s1, 4
      %s16 = int_to_ptr.hbm [resolvable:$true] %s15
      %s17 = sshll.u32 [#allocation2], 4
      %s18 = int_to_ptr.vmem [resolvable:$true] %s17
      %23 = dma.hbm_to_vmem [thread:$0]  %s16, 9216, %s18, [#allocation3], 256, 256, 16
    $region9: #{locally_connected_2d.1} parent=1 // pred_fallthru
      _
    // Predicated region
    $region10: #{locally_connected_2d.1} parent=1 // pred_check
      _
    $region11: #{locally_connected_2d.1} parent=1 // pred_check_branch
      %25 = sbr.rel (0) target = $region13
    $region12: #{locally_connected_2d.1} parent=1 // pred_region
      _
    $region13: #{locally_connected_2d.1} parent=1 // pred_fallthru
      _
    // Predicated region
    $region14: #{locally_connected_2d.1} parent=1 // pred_check
      _
    $region15: #{locally_connected_2d.1} parent=1 // pred_check_branch
      %27 = sbr.rel (0) target = $region17
    $region16: #{locally_connected_2d.1} parent=1 // pred_region
      %29 = dma.done [#allocation3], 9216
    $region17: #{locally_connected_2d.1} parent=1 // pred_fallthru
      _
    %v30 = vld [vmem:[%s2] sm:$0xff]
    %v31 = vld [vmem:[%s2 + $0x8] sm:$0xff]
    %v32 = vld [vmem:[%s0] ss:$4 sm:$0x3]
    %v34 = vperm.slane %v32, 0
    %v35 = vperm.slane %v32, 1
    %v38 = vld [vmem:[#allocation2] sm:$0xff]
    %v39 = vld [vmem:[#allocation2 + $0x8] sm:$0xff]
    %v40 = vmul.f32 %v34, %v38
    %v41 = vmul.f32 %v35, %v39
    %v42 = vadd.f32 %v30, %v40
    %v43 = vadd.f32 %v31, %v41
    %44 = vrot.lane.b32.xlu0 %v34, 127
    %v45 = vpop.permute.xlu0 %44
    %46 = vrot.lane.b32.xlu0 %v35, 127
    %v47 = vpop.permute.xlu0 %46
    %v48 = vlaneseq
    %v49 = vand.u32 %v48, 127
    %vm50 = vcmp.lt.s32.totalorder %v49, 127
    %v51 = vsel %vm50, %v45, %v47
    %v52 = vsel %vm50, %v47, %v45
    %s53 = scalar_lea.vmem [#allocation2], 16
    %v54 = vld [vmem:[%s53] sm:$0xff]
    %v55 = vld [vmem:[%s53 + $0x8] sm:$0xff]
    %v56 = vmul.f32 %v51, %v54
    %v57 = vmul.f32 %v52, %v55
    %v58 = vadd.f32 %v42, %v56
    %v59 = vadd.f32 %v43, %v57
    %60 = vrot.lane.b32.xlu0 %v34, 126
    %v61 = vpop.permute.xlu0 %60
    %62 = vrot.lane.b32.xlu0 %v35, 126
    %v63 = vpop.permute.xlu0 %62
    %vm64 = vcmp.lt.s32.totalorder %v49, 126
    %v65 = vsel %vm64, %v61, %v63
    %v66 = vsel %vm64, %v63, %v61
    %s67 = scalar_lea.vmem [#allocation2], 32
    %v68 = vld [vmem:[%s67] sm:$0xff]
    %v69 = vld [vmem:[%s67 + $0x8] sm:$0xff]
    %v70 = vmul.f32 %v65, %v68
    %v71 = vmul.f32 %v66, %v69
    %v72 = vadd.f32 %v58, %v70
    %v73 = vadd.f32 %v59, %v71
    %74 = vrot.lane.b32.xlu0 %v34, 112
    %v75 = vpop.permute.xlu0 %74
    %76 = vrot.lane.b32.xlu0 %v35, 112
    %v77 = vpop.permute.xlu0 %76
    %vm78 = vcmp.lt.s32.totalorder %v49, 112
    %v79 = vsel %vm78, %v75, %v77
    %v80 = vsel %vm78, %v77, %v75
    %s81 = scalar_lea.vmem [#allocation2], 48
    %v82 = vld [vmem:[%s81] sm:$0xff]
    %v83 = vld [vmem:[%s81 + $0x8] sm:$0xff]
    %v84 = vmul.f32 %v79, %v82
    %v85 = vmul.f32 %v80, %v83
    %v86 = vadd.f32 %v72, %v84
    %v87 = vadd.f32 %v73, %v85
    %88 = vrot.lane.b32.xlu0 %v34, 111
    %v89 = vpop.permute.xlu0 %88
    %90 = vrot.lane.b32.xlu0 %v35, 111
    %v91 = vpop.permute.xlu0 %90
    %vm92 = vcmp.lt.s32.totalorder %v49, 111
    %v93 = vsel %vm92, %v89, %v91
    %v94 = vsel %vm92, %v91, %v89
    %s95 = scalar_lea.vmem [#allocation2], 64
    %v96 = vld [vmem:[%s95] sm:$0xff]
    %v97 = vld [vmem:[%s95 + $0x8] sm:$0xff]
    %v98 = vmul.f32 %v93, %v96
    %v99 = vmul.f32 %v94, %v97
    %v100 = vadd.f32 %v86, %v98
    %v101 = vadd.f32 %v87, %v99
    %102 = vrot.lane.b32.xlu0 %v34, 110
    %v103 = vpop.permute.xlu0 %102
    %104 = vrot.lane.b32.xlu0 %v35, 110
    %v105 = vpop.permute.xlu0 %104
    %vm106 = vcmp.lt.s32.totalorder %v49, 110
    %v107 = vsel %vm106, %v103, %v105
    %v108 = vsel %vm106, %v105, %v103
    %s109 = scalar_lea.vmem [#allocation2], 80
    %v110 = vld [vmem:[%s109] sm:$0xff]
    %v111 = vld [vmem:[%s109 + $0x8] sm:$0xff]
    %v112 = vmul.f32 %v107, %v110
    %v113 = vmul.f32 %v108, %v111
    %v114 = vadd.f32 %v100, %v112
    %v115 = vadd.f32 %v101, %v113
    %116 = vrot.lane.b32.xlu0 %v34, 96
    %v117 = vpop.permute.xlu0 %116
    %118 = vrot.lane.b32.xlu0 %v35, 96
    %v119 = vpop.permute.xlu0 %118
    %vm120 = vcmp.lt.s32.totalorder %v49, 96
    %v121 = vsel %vm120, %v117, %v119
    %v122 = vsel %vm120, %v119, %v117
    %s123 = scalar_lea.vmem [#allocation2], 96
    %v124 = vld [vmem:[%s123] sm:$0xff]
    %v125 = vld [vmem:[%s123 + $0x8] sm:$0xff]
    %v126 = vmul.f32 %v121, %v124
    %v127 = vmul.f32 %v122, %v125
    %v128 = vadd.f32 %v114, %v126
    %v129 = vadd.f32 %v115, %v127
    %130 = vrot.lane.b32.xlu0 %v34, 95
    %v131 = vpop.permute.xlu0 %130
    %132 = vrot.lane.b32.xlu0 %v35, 95
    %v133 = vpop.permute.xlu0 %132
    %vm134 = vcmp.lt.s32.totalorder %v49, 95
    %v135 = vsel %vm134, %v131, %v133
    %v136 = vsel %vm134, %v133, %v131
    %s137 = scalar_lea.vmem [#allocation2], 112
    %v138 = vld [vmem:[%s137] sm:$0xff]
    %v139 = vld [vmem:[%s137 + $0x8] sm:$0xff]
    %v140 = vmul.f32 %v135, %v138
    %v141 = vmul.f32 %v136, %v139
    %v142 = vadd.f32 %v128, %v140
    %v143 = vadd.f32 %v129, %v141
    %144 = vrot.lane.b32.xlu0 %v34, 94
    %v145 = vpop.permute.xlu0 %144
    %146 = vrot.lane.b32.xlu0 %v35, 94
    %v147 = vpop.permute.xlu0 %146
    %vm148 = vcmp.lt.s32.totalorder %v49, 94
    %v149 = vsel %vm148, %v145, %v147
    %v150 = vsel %vm148, %v147, %v145
    %s151 = scalar_lea.vmem [#allocation2], 128
    %v152 = vld [vmem:[%s151] sm:$0xff]
    %v153 = vld [vmem:[%s151 + $0x8] sm:$0xff]
    %v154 = vmul.f32 %v149, %v152
    %v155 = vmul.f32 %v150, %v153
    %v156 = vadd.f32 %v142, %v154
    %v157 = vadd.f32 %v143, %v155
    %s158 = scalar_lea.vmem %s0, 1
    %v159 = vld [vmem:[%s158] ss:$4 sm:$0x3]
    %v161 = vperm.slane %v159, 0
    %v162 = vperm.slane %v159, 1
    %s165 = scalar_lea.vmem [#allocation2], 144
    %v166 = vld [vmem:[%s165] sm:$0xff]
    %v167 = vld [vmem:[%s165 + $0x8] sm:$0xff]
    %v168 = vmul.f32 %v161, %v166
    %v169 = vmul.f32 %v162, %v167
    %v170 = vadd.f32 %v156, %v168
    %v171 = vadd.f32 %v157, %v169
    %172 = vrot.lane.b32.xlu0 %v161, 127
    %v173 = vpop.permute.xlu0 %172
    %174 = vrot.lane.b32.xlu0 %v162, 127
    %v175 = vpop.permute.xlu0 %174
    %v176 = vsel %vm50, %v173, %v175
    %v177 = vsel %vm50, %v175, %v173
    %s178 = scalar_lea.vmem [#allocation2], 160
    %v179 = vld [vmem:[%s178] sm:$0xff]
    %v180 = vld [vmem:[%s178 + $0x8] sm:$0xff]
    %v181 = vmul.f32 %v176, %v179
    %v182 = vmul.f32 %v177, %v180
    %v183 = vadd.f32 %v170, %v181
    %v184 = vadd.f32 %v171, %v182
    %185 = vrot.lane.b32.xlu0 %v161, 126
    %v186 = vpop.permute.xlu0 %185
    %187 = vrot.lane.b32.xlu0 %v162, 126
    %v188 = vpop.permute.xlu0 %187
    %v189 = vsel %vm64, %v186, %v188
    %v190 = vsel %vm64, %v188, %v186
    %s191 = scalar_lea.vmem [#allocation2], 176
    %v192 = vld [vmem:[%s191] sm:$0xff]
    %v193 = vld [vmem:[%s191 + $0x8] sm:$0xff]
    %v194 = vmul.f32 %v189, %v192
    %v195 = vmul.f32 %v190, %v193
    %v196 = vadd.f32 %v183, %v194
    %v197 = vadd.f32 %v184, %v195
    %198 = vrot.lane.b32.xlu0 %v161, 112
    %v199 = vpop.permute.xlu0 %198
    %200 = vrot.lane.b32.xlu0 %v162, 112
    %v201 = vpop.permute.xlu0 %200
    %v202 = vsel %vm78, %v199, %v201
    %v203 = vsel %vm78, %v201, %v199
    %s204 = scalar_lea.vmem [#allocation2], 192
    %v205 = vld [vmem:[%s204] sm:$0xff]
    %v206 = vld [vmem:[%s204 + $0x8] sm:$0xff]
    %v207 = vmul.f32 %v202, %v205
    %v208 = vmul.f32 %v203, %v206
    %v209 = vadd.f32 %v196, %v207
    %v210 = vadd.f32 %v197, %v208
    %211 = vrot.lane.b32.xlu0 %v161, 111
    %v212 = vpop.permute.xlu0 %211
    %213 = vrot.lane.b32.xlu0 %v162, 111
    %v214 = vpop.permute.xlu0 %213
    %v215 = vsel %vm92, %v212, %v214
    %v216 = vsel %vm92, %v214, %v212
    %s217 = scalar_lea.vmem [#allocation2], 208
    %v218 = vld [vmem:[%s217] sm:$0xff]
    %v219 = vld [vmem:[%s217 + $0x8] sm:$0xff]
    %v220 = vmul.f32 %v215, %v218
    %v221 = vmul.f32 %v216, %v219
    %v222 = vadd.f32 %v209, %v220
    %v223 = vadd.f32 %v210, %v221
    %224 = vrot.lane.b32.xlu0 %v161, 110
    %v225 = vpop.permute.xlu0 %224
    %226 = vrot.lane.b32.xlu0 %v162, 110
    %v227 = vpop.permute.xlu0 %226
    %v228 = vsel %vm106, %v225, %v227
    %v229 = vsel %vm106, %v227, %v225
    %s230 = scalar_lea.vmem [#allocation2], 224
    %v231 = vld [vmem:[%s230] sm:$0xff]
    %v232 = vld [vmem:[%s230 + $0x8] sm:$0xff]
    %v233 = vmul.f32 %v228, %v231
    %v234 = vmul.f32 %v229, %v232
    %v235 = vadd.f32 %v222, %v233
    %v236 = vadd.f32 %v223, %v234
    %237 = vrot.lane.b32.xlu0 %v161, 96
    %v238 = vpop.permute.xlu0 %237
    %239 = vrot.lane.b32.xlu0 %v162, 96
    %v240 = vpop.permute.xlu0 %239
    %v241 = vsel %vm120, %v238, %v240
    %v242 = vsel %vm120, %v240, %v238
    %s243 = scalar_lea.vmem [#allocation2], 240
    %v244 = vld [vmem:[%s243] sm:$0xff]
    %v245 = vld [vmem:[%s243 + $0x8] sm:$0xff]
    %v246 = vmul.f32 %v241, %v244
    %v247 = vmul.f32 %v242, %v245
    %v248 = vadd.f32 %v235, %v246
    %v249 = vadd.f32 %v236, %v247
    %250 = vrot.lane.b32.xlu0 %v161, 95
    %v251 = vpop.permute.xlu0 %250
    %252 = vrot.lane.b32.xlu0 %v162, 95
    %v253 = vpop.permute.xlu0 %252
    %v254 = vsel %vm134, %v251, %v253
    %v255 = vsel %vm134, %v253, %v251
    %s256 = scalar_lea.vmem [#allocation2], 256
    %v257 = vld [vmem:[%s256] sm:$0xff]
    %v258 = vld [vmem:[%s256 + $0x8] sm:$0xff]
    %v259 = vmul.f32 %v254, %v257
    %v260 = vmul.f32 %v255, %v258
    %v261 = vadd.f32 %v248, %v259
    %v262 = vadd.f32 %v249, %v260
    %263 = vrot.lane.b32.xlu0 %v161, 94
    %v264 = vpop.permute.xlu0 %263
    %265 = vrot.lane.b32.xlu0 %v162, 94
    %v266 = vpop.permute.xlu0 %265
    %v267 = vsel %vm148, %v264, %v266
    %v268 = vsel %vm148, %v266, %v264
    %s269 = scalar_lea.vmem [#allocation2], 272
    %v270 = vld [vmem:[%s269] sm:$0xff]
    %v271 = vld [vmem:[%s269 + $0x8] sm:$0xff]
    %v272 = vmul.f32 %v267, %v270
    %v273 = vmul.f32 %v268, %v271
    %v274 = vadd.f32 %v261, %v272
    %v275 = vadd.f32 %v262, %v273
    %s276 = scalar_lea.vmem %s0, 2
    %v277 = vld [vmem:[%s276] ss:$4 sm:$0x3]
    %v279 = vperm.slane %v277, 0
    %v280 = vperm.slane %v277, 1
    %s283 = scalar_lea.vmem [#allocation2], 288
    %v284 = vld [vmem:[%s283] sm:$0xff]
    %v285 = vld [vmem:[%s283 + $0x8] sm:$0xff]
    %v286 = vmul.f32 %v279, %v284
    %v287 = vmul.f32 %v280, %v285
    %v288 = vadd.f32 %v274, %v286
    %v289 = vadd.f32 %v275, %v287
    %290 = vrot.lane.b32.xlu0 %v279, 127
    %v291 = vpop.permute.xlu0 %290
    %292 = vrot.lane.b32.xlu0 %v280, 127
    %v293 = vpop.permute.xlu0 %292
    %v294 = vsel %vm50, %v291, %v293
    %v295 = vsel %vm50, %v293, %v291
    %s296 = scalar_lea.vmem [#allocation2], 304
    %v297 = vld [vmem:[%s296] sm:$0xff]
    %v298 = vld [vmem:[%s296 + $0x8] sm:$0xff]
    %v299 = vmul.f32 %v294, %v297
    %v300 = vmul.f32 %v295, %v298
    %v301 = vadd.f32 %v288, %v299
    %v302 = vadd.f32 %v289, %v300
    %303 = vrot.lane.b32.xlu0 %v279, 126
    %v304 = vpop.permute.xlu0 %303
    %305 = vrot.lane.b32.xlu0 %v280, 126
    %v306 = vpop.permute.xlu0 %305
    %v307 = vsel %vm64, %v304, %v306
    %v308 = vsel %vm64, %v306, %v304
    %s309 = scalar_lea.vmem [#allocation2], 320
    %v310 = vld [vmem:[%s309] sm:$0xff]
    %v311 = vld [vmem:[%s309 + $0x8] sm:$0xff]
    %v312 = vmul.f32 %v307, %v310
    %v313 = vmul.f32 %v308, %v311
    %v314 = vadd.f32 %v301, %v312
    %v315 = vadd.f32 %v302, %v313
    %316 = vrot.lane.b32.xlu0 %v279, 112
    %v317 = vpop.permute.xlu0 %316
    %318 = vrot.lane.b32.xlu0 %v280, 112
    %v319 = vpop.permute.xlu0 %318
    %v320 = vsel %vm78, %v317, %v319
    %v321 = vsel %vm78, %v319, %v317
    %s322 = scalar_lea.vmem [#allocation2], 336
    %v323 = vld [vmem:[%s322] sm:$0xff]
    %v324 = vld [vmem:[%s322 + $0x8] sm:$0xff]
    %v325 = vmul.f32 %v320, %v323
    %v326 = vmul.f32 %v321, %v324
    %v327 = vadd.f32 %v314, %v325
    %v328 = vadd.f32 %v315, %v326
    %329 = vrot.lane.b32.xlu0 %v279, 111
    %v330 = vpop.permute.xlu0 %329
    %331 = vrot.lane.b32.xlu0 %v280, 111
    %v332 = vpop.permute.xlu0 %331
    %v333 = vsel %vm92, %v330, %v332
    %v334 = vsel %vm92, %v332, %v330
    %s335 = scalar_lea.vmem [#allocation2], 352
    %v336 = vld [vmem:[%s335] sm:$0xff]
    %v337 = vld [vmem:[%s335 + $0x8] sm:$0xff]
    %v338 = vmul.f32 %v333, %v336
    %v339 = vmul.f32 %v334, %v337
    %v340 = vadd.f32 %v327, %v338
    %v341 = vadd.f32 %v328, %v339
    %342 = vrot.lane.b32.xlu0 %v279, 110
    %v343 = vpop.permute.xlu0 %342
    %344 = vrot.lane.b32.xlu0 %v280, 110
    %v345 = vpop.permute.xlu0 %344
    %v346 = vsel %vm106, %v343, %v345
    %v347 = vsel %vm106, %v345, %v343
    %s348 = scalar_lea.vmem [#allocation2], 368
    %v349 = vld [vmem:[%s348] sm:$0xff]
    %v350 = vld [vmem:[%s348 + $0x8] sm:$0xff]
    %v351 = vmul.f32 %v346, %v349
    %v352 = vmul.f32 %v347, %v350
    %v353 = vadd.f32 %v340, %v351
    %v354 = vadd.f32 %v341, %v352
    %355 = vrot.lane.b32.xlu0 %v279, 96
    %v356 = vpop.permute.xlu0 %355
    %357 = vrot.lane.b32.xlu0 %v280, 96
    %v358 = vpop.permute.xlu0 %357
    %v359 = vsel %vm120, %v356, %v358
    %v360 = vsel %vm120, %v358, %v356
    %s361 = scalar_lea.vmem [#allocation2], 384
    %v362 = vld [vmem:[%s361] sm:$0xff]
    %v363 = vld [vmem:[%s361 + $0x8] sm:$0xff]
    %v364 = vmul.f32 %v359, %v362
    %v365 = vmul.f32 %v360, %v363
    %v366 = vadd.f32 %v353, %v364
    %v367 = vadd.f32 %v354, %v365
    %368 = vrot.lane.b32.xlu0 %v279, 95
    %v369 = vpop.permute.xlu0 %368
    %370 = vrot.lane.b32.xlu0 %v280, 95
    %v371 = vpop.permute.xlu0 %370
    %v372 = vsel %vm134, %v369, %v371
    %v373 = vsel %vm134, %v371, %v369
    %s374 = scalar_lea.vmem [#allocation2], 400
    %v375 = vld [vmem:[%s374] sm:$0xff]
    %v376 = vld [vmem:[%s374 + $0x8] sm:$0xff]
    %v377 = vmul.f32 %v372, %v375
    %v378 = vmul.f32 %v373, %v376
    %v379 = vadd.f32 %v366, %v377
    %v380 = vadd.f32 %v367, %v378
    %381 = vrot.lane.b32.xlu0 %v279, 94
    %v382 = vpop.permute.xlu0 %381
    %383 = vrot.lane.b32.xlu0 %v280, 94
    %v384 = vpop.permute.xlu0 %383
    %v385 = vsel %vm148, %v382, %v384
    %v386 = vsel %vm148, %v384, %v382
    %s387 = scalar_lea.vmem [#allocation2], 416
    %v388 = vld [vmem:[%s387] sm:$0xff]
    %v389 = vld [vmem:[%s387 + $0x8] sm:$0xff]
    %v390 = vmul.f32 %v385, %v388
    %v391 = vmul.f32 %v386, %v389
    %v392 = vadd.f32 %v379, %v390
    %v393 = vadd.f32 %v380, %v391
    %s394 = scalar_lea.vmem %s0, 3
    %v395 = vld [vmem:[%s394] ss:$4 sm:$0x3]
    %v397 = vperm.slane %v395, 0
    %v398 = vperm.slane %v395, 1
    %s401 = scalar_lea.vmem [#allocation2], 432
    %v402 = vld [vmem:[%s401] sm:$0xff]
    %v403 = vld [vmem:[%s401 + $0x8] sm:$0xff]
    %v404 = vmul.f32 %v397, %v402
    %v405 = vmul.f32 %v398, %v403
    %v406 = vadd.f32 %v392, %v404
    %v407 = vadd.f32 %v393, %v405
    %408 = vrot.lane.b32.xlu0 %v397, 127
    %v409 = vpop.permute.xlu0 %408
    %410 = vrot.lane.b32.xlu0 %v398, 127
    %v411 = vpop.permute.xlu0 %410
    %v412 = vsel %vm50, %v409, %v411
    %v413 = vsel %vm50, %v411, %v409
    %s414 = scalar_lea.vmem [#allocation2], 448
    %v415 = vld [vmem:[%s414] sm:$0xff]
    %v416 = vld [vmem:[%s414 + $0x8] sm:$0xff]
    %v417 = vmul.f32 %v412, %v415
    %v418 = vmul.f32 %v413, %v416
    %v419 = vadd.f32 %v406, %v417
    %v420 = vadd.f32 %v407, %v418
    %421 = vrot.lane.b32.xlu0 %v397, 126
    %v422 = vpop.permute.xlu0 %421
    %423 = vrot.lane.b32.xlu0 %v398, 126
    %v424 = vpop.permute.xlu0 %423
    %v425 = vsel %vm64, %v422, %v424
    %v426 = vsel %vm64, %v424, %v422
    %s427 = scalar_lea.vmem [#allocation2], 464
    %v428 = vld [vmem:[%s427] sm:$0xff]
    %v429 = vld [vmem:[%s427 + $0x8] sm:$0xff]
    %v430 = vmul.f32 %v425, %v428
    %v431 = vmul.f32 %v426, %v429
    %v432 = vadd.f32 %v419, %v430
    %v433 = vadd.f32 %v420, %v431
    %434 = vrot.lane.b32.xlu0 %v397, 112
    %v435 = vpop.permute.xlu0 %434
    %436 = vrot.lane.b32.xlu0 %v398, 112
    %v437 = vpop.permute.xlu0 %436
    %v438 = vsel %vm78, %v435, %v437
    %v439 = vsel %vm78, %v437, %v435
    %s440 = scalar_lea.vmem [#allocation2], 480
    %v441 = vld [vmem:[%s440] sm:$0xff]
    %v442 = vld [vmem:[%s440 + $0x8] sm:$0xff]
    %v443 = vmul.f32 %v438, %v441
    %v444 = vmul.f32 %v439, %v442
    %v445 = vadd.f32 %v432, %v443
    %v446 = vadd.f32 %v433, %v444
    %447 = vrot.lane.b32.xlu0 %v397, 111
    %v448 = vpop.permute.xlu0 %447
    %449 = vrot.lane.b32.xlu0 %v398, 111
    %v450 = vpop.permute.xlu0 %449
    %v451 = vsel %vm92, %v448, %v450
    %v452 = vsel %vm92, %v450, %v448
    %s453 = scalar_lea.vmem [#allocation2], 496
    %v454 = vld [vmem:[%s453] sm:$0xff]
    %v455 = vld [vmem:[%s453 + $0x8] sm:$0xff]
    %v456 = vmul.f32 %v451, %v454
    %v457 = vmul.f32 %v452, %v455
    %v458 = vadd.f32 %v445, %v456
    %v459 = vadd.f32 %v446, %v457
    %460 = vrot.lane.b32.xlu0 %v397, 110
    %v461 = vpop.permute.xlu0 %460
    %462 = vrot.lane.b32.xlu0 %v398, 110
    %v463 = vpop.permute.xlu0 %462
    %v464 = vsel %vm106, %v461, %v463
    %v465 = vsel %vm106, %v463, %v461
    %s466 = scalar_lea.vmem [#allocation2], 512
    %v467 = vld [vmem:[%s466] sm:$0xff]
    %v468 = vld [vmem:[%s466 + $0x8] sm:$0xff]
    %v469 = vmul.f32 %v464, %v467
    %v470 = vmul.f32 %v465, %v468
    %v471 = vadd.f32 %v458, %v469
    %v472 = vadd.f32 %v459, %v470
    %473 = vrot.lane.b32.xlu0 %v397, 96
    %v474 = vpop.permute.xlu0 %473
    %475 = vrot.lane.b32.xlu0 %v398, 96
    %v476 = vpop.permute.xlu0 %475
    %v477 = vsel %vm120, %v474, %v476
    %v478 = vsel %vm120, %v476, %v474
    %s479 = scalar_lea.vmem [#allocation2], 528
    %v480 = vld [vmem:[%s479] sm:$0xff]
    %v481 = vld [vmem:[%s479 + $0x8] sm:$0xff]
    %v482 = vmul.f32 %v477, %v480
    %v483 = vmul.f32 %v478, %v481
    %v484 = vadd.f32 %v471, %v482
    %v485 = vadd.f32 %v472, %v483
    %486 = vrot.lane.b32.xlu0 %v397, 95
    %v487 = vpop.permute.xlu0 %486
    %488 = vrot.lane.b32.xlu0 %v398, 95
    %v489 = vpop.permute.xlu0 %488
    %v490 = vsel %vm134, %v487, %v489
    %v491 = vsel %vm134, %v489, %v487
    %s492 = scalar_lea.vmem [#allocation2], 544
    %v493 = vld [vmem:[%s492] sm:$0xff]
    %v494 = vld [vmem:[%s492 + $0x8] sm:$0xff]
    %v495 = vmul.f32 %v490, %v493
    %v496 = vmul.f32 %v491, %v494
    %v497 = vadd.f32 %v484, %v495
    %v498 = vadd.f32 %v485, %v496
    %499 = vrot.lane.b32.xlu0 %v397, 94
    %v500 = vpop.permute.xlu0 %499
    %501 = vrot.lane.b32.xlu0 %v398, 94
    %v502 = vpop.permute.xlu0 %501
    %v503 = vsel %vm148, %v500, %v502
    %v504 = vsel %vm148, %v502, %v500
    %s505 = scalar_lea.vmem [#allocation2], 560
    %v506 = vld [vmem:[%s505] sm:$0xff]
    %v507 = vld [vmem:[%s505 + $0x8] sm:$0xff]
    %v508 = vmul.f32 %v503, %v506
    %v509 = vmul.f32 %v504, %v507
    %v510 = vadd.f32 %v497, %v508
    %v511 = vadd.f32 %v498, %v509
    %512 = vst [vmem:[%s3] sm:$0xff] %v510
    %513 = vst [vmem:[%s3 + $0x8] sm:$0xff] %v511
    %s514 = scalar_lea.vmem %s0, 8
    %v515 = vld [vmem:[%s514] ss:$4 sm:$0x3]
    %v517 = vperm.slane %v515, 0
    %v518 = vperm.slane %v515, 1
    %v521 = vld [vmem:[#allocation2] sm:$0xff]
    %v522 = vld [vmem:[#allocation2 + $0x8] sm:$0xff]
    %v523 = vmul.f32 %v517, %v521
    %v524 = vmul.f32 %v518, %v522
    %v525 = vadd.f32 %v30, %v523
    %v526 = vadd.f32 %v31, %v524
    %527 = vrot.lane.b32.xlu0 %v517, 127
    %v528 = vpop.permute.xlu0 %527
    %529 = vrot.lane.b32.xlu0 %v518, 127
    %v530 = vpop.permute.xlu0 %529
    %v531 = vsel %vm50, %v528, %v530
    %v532 = vsel %vm50, %v530, %v528
    %v533 = vld [vmem:[%s53] sm:$0xff]
    %v534 = vld [vmem:[%s53 + $0x8] sm:$0xff]
    %v535 = vmul.f32 %v531, %v533
    %v536 = vmul.f32 %v532, %v534
    %v537 = vadd.f32 %v525, %v535
    %v538 = vadd.f32 %v526, %v536
    %539 = vrot.lane.b32.xlu0 %v517, 126
    %v540 = vpop.permute.xlu0 %539
    %541 = vrot.lane.b32.xlu0 %v518, 126
    %v542 = vpop.permute.xlu0 %541
    %v543 = vsel %vm64, %v540, %v542
    %v544 = vsel %vm64, %v542, %v540
    %v545 = vld [vmem:[%s67] sm:$0xff]
    %v546 = vld [vmem:[%s67 + $0x8] sm:$0xff]
    %v547 = vmul.f32 %v543, %v545
    %v548 = vmul.f32 %v544, %v546
    %v549 = vadd.f32 %v537, %v547
    %v550 = vadd.f32 %v538, %v548
    %551 = vrot.lane.b32.xlu0 %v517, 112
    %v552 = vpop.permute.xlu0 %551
    %553 = vrot.lane.b32.xlu0 %v518, 112
    %v554 = vpop.permute.xlu0 %553
    %v555 = vsel %vm78, %v552, %v554
    %v556 = vsel %vm78, %v554, %v552
    %v557 = vld [vmem:[%s81] sm:$0xff]
    %v558 = vld [vmem:[%s81 + $0x8] sm:$0xff]
    %v559 = vmul.f32 %v555, %v557
    %v560 = vmul.f32 %v556, %v558
    %v561 = vadd.f32 %v549, %v559
    %v562 = vadd.f32 %v550, %v560
    %563 = vrot.lane.b32.xlu0 %v517, 111
    %v564 = vpop.permute.xlu0 %563
    %565 = vrot.lane.b32.xlu0 %v518, 111
    %v566 = vpop.permute.xlu0 %565
    %v567 = vsel %vm92, %v564, %v566
    %v568 = vsel %vm92, %v566, %v564
    %v569 = vld [vmem:[%s95] sm:$0xff]
    %v570 = vld [vmem:[%s95 + $0x8] sm:$0xff]
    %v571 = vmul.f32 %v567, %v569
    %v572 = vmul.f32 %v568, %v570
    %v573 = vadd.f32 %v561, %v571
    %v574 = vadd.f32 %v562, %v572
    %575 = vrot.lane.b32.xlu0 %v517, 110
    %v576 = vpop.permute.xlu0 %575
    %577 = vrot.lane.b32.xlu0 %v518, 110
    %v578 = vpop.permute.xlu0 %577
    %v579 = vsel %vm106, %v576, %v578
    %v580 = vsel %vm106, %v578, %v576
    %v581 = vld [vmem:[%s109] sm:$0xff]
    %v582 = vld [vmem:[%s109 + $0x8] sm:$0xff]
    %v583 = vmul.f32 %v579, %v581
    %v584 = vmul.f32 %v580, %v582
    %v585 = vadd.f32 %v573, %v583
    %v586 = vadd.f32 %v574, %v584
    %587 = vrot.lane.b32.xlu0 %v517, 96
    %v588 = vpop.permute.xlu0 %587
    %589 = vrot.lane.b32.xlu0 %v518, 96
    %v590 = vpop.permute.xlu0 %589
    %v591 = vsel %vm120, %v588, %v590
    %v592 = vsel %vm120, %v590, %v588
    %v593 = vld [vmem:[%s123] sm:$0xff]
    %v594 = vld [vmem:[%s123 + $0x8] sm:$0xff]
    %v595 = vmul.f32 %v591, %v593
    %v596 = vmul.f32 %v592, %v594
    %v597 = vadd.f32 %v585, %v595
    %v598 = vadd.f32 %v586, %v596
    %599 = vrot.lane.b32.xlu0 %v517, 95
    %v600 = vpop.permute.xlu0 %599
    %601 = vrot.lane.b32.xlu0 %v518, 95
    %v602 = vpop.permute.xlu0 %601
    %v603 = vsel %vm134, %v600, %v602
    %v604 = vsel %vm134, %v602, %v600
    %v605 = vld [vmem:[%s137] sm:$0xff]
    %v606 = vld [vmem:[%s137 + $0x8] sm:$0xff]
    %v607 = vmul.f32 %v603, %v605
    %v608 = vmul.f32 %v604, %v606
    %v609 = vadd.f32 %v597, %v607
    %v610 = vadd.f32 %v598, %v608
    %611 = vrot.lane.b32.xlu0 %v517, 94
    %v612 = vpop.permute.xlu0 %611
    %613 = vrot.lane.b32.xlu0 %v518, 94
    %v614 = vpop.permute.xlu0 %613
    %v615 = vsel %vm148, %v612, %v614
    %v616 = vsel %vm148, %v614, %v612
    %v617 = vld [vmem:[%s151] sm:$0xff]
    %v618 = vld [vmem:[%s151 + $0x8] sm:$0xff]
    %v619 = vmul.f32 %v615, %v617
    %v620 = vmul.f32 %v616, %v618
    %v621 = vadd.f32 %v609, %v619
    %v622 = vadd.f32 %v610, %v620
    %s623 = scalar_lea.vmem %s514, 1
    %v624 = vld [vmem:[%s623] ss:$4 sm:$0x3]
    %v626 = vperm.slane %v624, 0
    %v627 = vperm.slane %v624, 1
    %v630 = vld [vmem:[%s165] sm:$0xff]
    %v631 = vld [vmem:[%s165 + $0x8] sm:$0xff]
    %v632 = vmul.f32 %v626, %v630
    %v633 = vmul.f32 %v627, %v631
    %v634 = vadd.f32 %v621, %v632
    %v635 = vadd.f32 %v622, %v633
    %636 = vrot.lane.b32.xlu0 %v626, 127
    %v637 = vpop.permute.xlu0 %636
    %638 = vrot.lane.b32.xlu0 %v627, 127
    %v639 = vpop.permute.xlu0 %638
    %v640 = vsel %vm50, %v637, %v639
    %v641 = vsel %vm50, %v639, %v637
    %v642 = vld [vmem:[%s178] sm:$0xff]
    %v643 = vld [vmem:[%s178 + $0x8] sm:$0xff]
    %v644 = vmul.f32 %v640, %v642
    %v645 = vmul.f32 %v641, %v643
    %v646 = vadd.f32 %v634, %v644
    %v647 = vadd.f32 %v635, %v645
    %648 = vrot.lane.b32.xlu0 %v626, 126
    %v649 = vpop.permute.xlu0 %648
    %650 = vrot.lane.b32.xlu0 %v627, 126
    %v651 = vpop.permute.xlu0 %650
    %v652 = vsel %vm64, %v649, %v651
    %v653 = vsel %vm64, %v651, %v649
    %v654 = vld [vmem:[%s191] sm:$0xff]
    %v655 = vld [vmem:[%s191 + $0x8] sm:$0xff]
    %v656 = vmul.f32 %v652, %v654
    %v657 = vmul.f32 %v653, %v655
    %v658 = vadd.f32 %v646, %v656
    %v659 = vadd.f32 %v647, %v657
    %660 = vrot.lane.b32.xlu0 %v626, 112
    %v661 = vpop.permute.xlu0 %660
    %662 = vrot.lane.b32.xlu0 %v627, 112
    %v663 = vpop.permute.xlu0 %662
    %v664 = vsel %vm78, %v661, %v663
    %v665 = vsel %vm78, %v663, %v661
    %v666 = vld [vmem:[%s204] sm:$0xff]
    %v667 = vld [vmem:[%s204 + $0x8] sm:$0xff]
    %v668 = vmul.f32 %v664, %v666
    %v669 = vmul.f32 %v665, %v667
    %v670 = vadd.f32 %v658, %v668
    %v671 = vadd.f32 %v659, %v669
    %672 = vrot.lane.b32.xlu0 %v626, 111
    %v673 = vpop.permute.xlu0 %672
    %674 = vrot.lane.b32.xlu0 %v627, 111
    %v675 = vpop.permute.xlu0 %674
    %v676 = vsel %vm92, %v673, %v675
    %v677 = vsel %vm92, %v675, %v673
    %v678 = vld [vmem:[%s217] sm:$0xff]
    %v679 = vld [vmem:[%s217 + $0x8] sm:$0xff]
    %v680 = vmul.f32 %v676, %v678
    %v681 = vmul.f32 %v677, %v679
    %v682 = vadd.f32 %v670, %v680
    %v683 = vadd.f32 %v671, %v681
    %684 = vrot.lane.b32.xlu0 %v626, 110
    %v685 = vpop.permute.xlu0 %684
    %686 = vrot.lane.b32.xlu0 %v627, 110
    %v687 = vpop.permute.xlu0 %686
    %v688 = vsel %vm106, %v685, %v687
    %v689 = vsel %vm106, %v687, %v685
    %v690 = vld [vmem:[%s230] sm:$0xff]
    %v691 = vld [vmem:[%s230 + $0x8] sm:$0xff]
    %v692 = vmul.f32 %v688, %v690
    %v693 = vmul.f32 %v689, %v691
    %v694 = vadd.f32 %v682, %v692
    %v695 = vadd.f32 %v683, %v693
    %696 = vrot.lane.b32.xlu0 %v626, 96
    %v697 = vpop.permute.xlu0 %696
    %698 = vrot.lane.b32.xlu0 %v627, 96
    %v699 = vpop.permute.xlu0 %698
    %v700 = vsel %vm120, %v697, %v699
    %v701 = vsel %vm120, %v699, %v697
    %v702 = vld [vmem:[%s243] sm:$0xff]
    %v703 = vld [vmem:[%s243 + $0x8] sm:$0xff]
    %v704 = vmul.f32 %v700, %v702
    %v705 = vmul.f32 %v701, %v703
    %v706 = vadd.f32 %v694, %v704
    %v707 = vadd.f32 %v695, %v705
    %708 = vrot.lane.b32.xlu0 %v626, 95
    %v709 = vpop.permute.xlu0 %708
    %710 = vrot.lane.b32.xlu0 %v627, 95
    %v711 = vpop.permute.xlu0 %710
    %v712 = vsel %vm134, %v709, %v711
    %v713 = vsel %vm134, %v711, %v709
    %v714 = vld [vmem:[%s256] sm:$0xff]
    %v715 = vld [vmem:[%s256 + $0x8] sm:$0xff]
    %v716 = vmul.f32 %v712, %v714
    %v717 = vmul.f32 %v713, %v715
    %v718 = vadd.f32 %v706, %v716
    %v719 = vadd.f32 %v707, %v717
    %720 = vrot.lane.b32.xlu0 %v626, 94
    %v721 = vpop.permute.xlu0 %720
    %722 = vrot.lane.b32.xlu0 %v627, 94
    %v723 = vpop.permute.xlu0 %722
    %v724 = vsel %vm148, %v721, %v723
    %v725 = vsel %vm148, %v723, %v721
    %v726 = vld [vmem:[%s269] sm:$0xff]
    %v727 = vld [vmem:[%s269 + $0x8] sm:$0xff]
    %v728 = vmul.f32 %v724, %v726
    %v729 = vmul.f32 %v725, %v727
    %v730 = vadd.f32 %v718, %v728
    %v731 = vadd.f32 %v719, %v729
    %s732 = scalar_lea.vmem %s514, 2
    %v733 = vld [vmem:[%s732] ss:$4 sm:$0x3]
    %v735 = vperm.slane %v733, 0
    %v736 = vperm.slane %v733, 1
    %v739 = vld [vmem:[%s283] sm:$0xff]
    %v740 = vld [vmem:[%s283 + $0x8] sm:$0xff]
    %v741 = vmul.f32 %v735, %v739
    %v742 = vmul.f32 %v736, %v740
    %v743 = vadd.f32 %v730, %v741
    %v744 = vadd.f32 %v731, %v742
    %745 = vrot.lane.b32.xlu0 %v735, 127
    %v746 = vpop.permute.xlu0 %745
    %747 = vrot.lane.b32.xlu0 %v736, 127
    %v748 = vpop.permute.xlu0 %747
    %v749 = vsel %vm50, %v746, %v748
    %v750 = vsel %vm50, %v748, %v746
    %v751 = vld [vmem:[%s296] sm:$0xff]
    %v752 = vld [vmem:[%s296 + $0x8] sm:$0xff]
    %v753 = vmul.f32 %v749, %v751
    %v754 = vmul.f32 %v750, %v752
    %v755 = vadd.f32 %v743, %v753
    %v756 = vadd.f32 %v744, %v754
    %757 = vrot.lane.b32.xlu0 %v735, 126
    %v758 = vpop.permute.xlu0 %757
    %759 = vrot.lane.b32.xlu0 %v736, 126
    %v760 = vpop.permute.xlu0 %759
    %v761 = vsel %vm64, %v758, %v760
    %v762 = vsel %vm64, %v760, %v758
    %v763 = vld [vmem:[%s309] sm:$0xff]
    %v764 = vld [vmem:[%s309 + $0x8] sm:$0xff]
    %v765 = vmul.f32 %v761, %v763
    %v766 = vmul.f32 %v762, %v764
    %v767 = vadd.f32 %v755, %v765
    %v768 = vadd.f32 %v756, %v766
    %769 = vrot.lane.b32.xlu0 %v735, 112
    %v770 = vpop.permute.xlu0 %769
    %771 = vrot.lane.b32.xlu0 %v736, 112
    %v772 = vpop.permute.xlu0 %771
    %v773 = vsel %vm78, %v770, %v772
    %v774 = vsel %vm78, %v772, %v770
    %v775 = vld [vmem:[%s322] sm:$0xff]
    %v776 = vld [vmem:[%s322 + $0x8] sm:$0xff]
    %v777 = vmul.f32 %v773, %v775
    %v778 = vmul.f32 %v774, %v776
    %v779 = vadd.f32 %v767, %v777
    %v780 = vadd.f32 %v768, %v778
    %781 = vrot.lane.b32.xlu0 %v735, 111
    %v782 = vpop.permute.xlu0 %781
    %783 = vrot.lane.b32.xlu0 %v736, 111
    %v784 = vpop.permute.xlu0 %783
    %v785 = vsel %vm92, %v782, %v784
    %v786 = vsel %vm92, %v784, %v782
    %v787 = vld [vmem:[%s335] sm:$0xff]
    %v788 = vld [vmem:[%s335 + $0x8] sm:$0xff]
    %v789 = vmul.f32 %v785, %v787
    %v790 = vmul.f32 %v786, %v788
    %v791 = vadd.f32 %v779, %v789
    %v792 = vadd.f32 %v780, %v790
    %793 = vrot.lane.b32.xlu0 %v735, 110
    %v794 = vpop.permute.xlu0 %793
    %795 = vrot.lane.b32.xlu0 %v736, 110
    %v796 = vpop.permute.xlu0 %795
    %v797 = vsel %vm106, %v794, %v796
    %v798 = vsel %vm106, %v796, %v794
    %v799 = vld [vmem:[%s348] sm:$0xff]
    %v800 = vld [vmem:[%s348 + $0x8] sm:$0xff]
    %v801 = vmul.f32 %v797, %v799
    %v802 = vmul.f32 %v798, %v800
    %v803 = vadd.f32 %v791, %v801
    %v804 = vadd.f32 %v792, %v802
    %805 = vrot.lane.b32.xlu0 %v735, 96
    %v806 = vpop.permute.xlu0 %805
    %807 = vrot.lane.b32.xlu0 %v736, 96
    %v808 = vpop.permute.xlu0 %807
    %v809 = vsel %vm120, %v806, %v808
    %v810 = vsel %vm120, %v808, %v806
    %v811 = vld [vmem:[%s361] sm:$0xff]
    %v812 = vld [vmem:[%s361 + $0x8] sm:$0xff]
    %v813 = vmul.f32 %v809, %v811
    %v814 = vmul.f32 %v810, %v812
    %v815 = vadd.f32 %v803, %v813
    %v816 = vadd.f32 %v804, %v814
    %817 = vrot.lane.b32.xlu0 %v735, 95
    %v818 = vpop.permute.xlu0 %817
    %819 = vrot.lane.b32.xlu0 %v736, 95
    %v820 = vpop.permute.xlu0 %819
    %v821 = vsel %vm134, %v818, %v820
    %v822 = vsel %vm134, %v820, %v818
    %v823 = vld [vmem:[%s374] sm:$0xff]
    %v824 = vld [vmem:[%s374 + $0x8] sm:$0xff]
    %v825 = vmul.f32 %v821, %v823
    %v826 = vmul.f32 %v822, %v824
    %v827 = vadd.f32 %v815, %v825
    %v828 = vadd.f32 %v816, %v826
    %829 = vrot.lane.b32.xlu0 %v735, 94
    %v830 = vpop.permute.xlu0 %829
    %831 = vrot.lane.b32.xlu0 %v736, 94
    %v832 = vpop.permute.xlu0 %831
    %v833 = vsel %vm148, %v830, %v832
    %v834 = vsel %vm148, %v832, %v830
    %v835 = vld [vmem:[%s387] sm:$0xff]
    %v836 = vld [vmem:[%s387 + $0x8] sm:$0xff]
    %v837 = vmul.f32 %v833, %v835
    %v838 = vmul.f32 %v834, %v836
    %v839 = vadd.f32 %v827, %v837
    %v840 = vadd.f32 %v828, %v838
    %s841 = scalar_lea.vmem %s514, 3
    %v842 = vld [vmem:[%s841] ss:$4 sm:$0x3]
    %v844 = vperm.slane %v842, 0
    %v845 = vperm.slane %v842, 1
    %v848 = vld [vmem:[%s401] sm:$0xff]
    %v849 = vld [vmem:[%s401 + $0x8] sm:$0xff]
    %v850 = vmul.f32 %v844, %v848
    %v851 = vmul.f32 %v845, %v849
    %v852 = vadd.f32 %v839, %v850
    %v853 = vadd.f32 %v840, %v851
    %854 = vrot.lane.b32.xlu0 %v844, 127
    %v855 = vpop.permute.xlu0 %854
    %856 = vrot.lane.b32.xlu0 %v845, 127
    %v857 = vpop.permute.xlu0 %856
    %v858 = vsel %vm50, %v855, %v857
    %v859 = vsel %vm50, %v857, %v855
    %v860 = vld [vmem:[%s414] sm:$0xff]
    %v861 = vld [vmem:[%s414 + $0x8] sm:$0xff]
    %v862 = vmul.f32 %v858, %v860
    %v863 = vmul.f32 %v859, %v861
    %v864 = vadd.f32 %v852, %v862
    %v865 = vadd.f32 %v853, %v863
    %866 = vrot.lane.b32.xlu0 %v844, 126
    %v867 = vpop.permute.xlu0 %866
    %868 = vrot.lane.b32.xlu0 %v845, 126
    %v869 = vpop.permute.xlu0 %868
    %v870 = vsel %vm64, %v867, %v869
    %v871 = vsel %vm64, %v869, %v867
    %v872 = vld [vmem:[%s427] sm:$0xff]
    %v873 = vld [vmem:[%s427 + $0x8] sm:$0xff]
    %v874 = vmul.f32 %v870, %v872
    %v875 = vmul.f32 %v871, %v873
    %v876 = vadd.f32 %v864, %v874
    %v877 = vadd.f32 %v865, %v875
    %878 = vrot.lane.b32.xlu0 %v844, 112
    %v879 = vpop.permute.xlu0 %878
    %880 = vrot.lane.b32.xlu0 %v845, 112
    %v881 = vpop.permute.xlu0 %880
    %v882 = vsel %vm78, %v879, %v881
    %v883 = vsel %vm78, %v881, %v879
    %v884 = vld [vmem:[%s440] sm:$0xff]
    %v885 = vld [vmem:[%s440 + $0x8] sm:$0xff]
    %v886 = vmul.f32 %v882, %v884
    %v887 = vmul.f32 %v883, %v885
    %v888 = vadd.f32 %v876, %v886
    %v889 = vadd.f32 %v877, %v887
    %890 = vrot.lane.b32.xlu0 %v844, 111
    %v891 = vpop.permute.xlu0 %890
    %892 = vrot.lane.b32.xlu0 %v845, 111
    %v893 = vpop.permute.xlu0 %892
    %v894 = vsel %vm92, %v891, %v893
    %v895 = vsel %vm92, %v893, %v891
    %v896 = vld [vmem:[%s453] sm:$0xff]
    %v897 = vld [vmem:[%s453 + $0x8] sm:$0xff]
    %v898 = vmul.f32 %v894, %v896
    %v899 = vmul.f32 %v895, %v897
    %v900 = vadd.f32 %v888, %v898
    %v901 = vadd.f32 %v889, %v899
    %902 = vrot.lane.b32.xlu0 %v844, 110
    %v903 = vpop.permute.xlu0 %902
    %904 = vrot.lane.b32.xlu0 %v845, 110
    %v905 = vpop.permute.xlu0 %904
    %v906 = vsel %vm106, %v903, %v905
    %v907 = vsel %vm106, %v905, %v903
    %v908 = vld [vmem:[%s466] sm:$0xff]
    %v909 = vld [vmem:[%s466 + $0x8] sm:$0xff]
    %v910 = vmul.f32 %v906, %v908
    %v911 = vmul.f32 %v907, %v909
    %v912 = vadd.f32 %v900, %v910
    %v913 = vadd.f32 %v901, %v911
    %914 = vrot.lane.b32.xlu0 %v844, 96
    %v915 = vpop.permute.xlu0 %914
    %916 = vrot.lane.b32.xlu0 %v845, 96
    %v917 = vpop.permute.xlu0 %916
    %v918 = vsel %vm120, %v915, %v917
    %v919 = vsel %vm120, %v917, %v915
    %v920 = vld [vmem:[%s479] sm:$0xff]
    %v921 = vld [vmem:[%s479 + $0x8] sm:$0xff]
    %v922 = vmul.f32 %v918, %v920
    %v923 = vmul.f32 %v919, %v921
    %v924 = vadd.f32 %v912, %v922
    %v925 = vadd.f32 %v913, %v923
    %926 = vrot.lane.b32.xlu0 %v844, 95
    %v927 = vpop.permute.xlu0 %926
    %928 = vrot.lane.b32.xlu0 %v845, 95
    %v929 = vpop.permute.xlu0 %928
    %v930 = vsel %vm134, %v927, %v929
    %v931 = vsel %vm134, %v929, %v927
    %v932 = vld [vmem:[%s492] sm:$0xff]
    %v933 = vld [vmem:[%s492 + $0x8] sm:$0xff]
    %v934 = vmul.f32 %v930, %v932
    %v935 = vmul.f32 %v931, %v933
    %v936 = vadd.f32 %v924, %v934
    %v937 = vadd.f32 %v925, %v935
    %938 = vrot.lane.b32.xlu0 %v844, 94
    %v939 = vpop.permute.xlu0 %938
    %940 = vrot.lane.b32.xlu0 %v845, 94
    %v941 = vpop.permute.xlu0 %940
    %v942 = vsel %vm148, %v939, %v941
    %v943 = vsel %vm148, %v941, %v939
    %v944 = vld [vmem:[%s505] sm:$0xff]
    %v945 = vld [vmem:[%s505 + $0x8] sm:$0xff]
    %v946 = vmul.f32 %v942, %v944
    %v947 = vmul.f32 %v943, %v945
    %v948 = vadd.f32 %v936, %v946
    %v949 = vadd.f32 %v937, %v947
    %s950 = scalar_lea.vmem %s3, 16
    %951 = vst [vmem:[%s950] sm:$0xff] %v948
    %952 = vst [vmem:[%s950 + $0x8] sm:$0xff] %v949
    // Predicated region
    $region18: #{locally_connected_2d.1} parent=1 // pred_check
      _
    $region19: #{locally_connected_2d.1} parent=1 // pred_check_branch
      %954 = sbr.rel (0) target = $region21
    $region20: #{locally_connected_2d.1} parent=1 // pred_region
      _
    $region21: #{locally_connected_2d.1} parent=1 // pred_fallthru
      _
    // Predicated region
    $region22: #{locally_connected_2d.1} parent=1 // pred_check
      _
    $region23: #{locally_connected_2d.1} parent=1 // pred_check_branch
      %956 = sbr.rel (0) target = $region25
    $region24: #{locally_connected_2d.1} parent=1 // pred_region
      _
    $region25: #{locally_connected_2d.1} parent=1 // pred_fallthru
      _
    %957 = vsyncpa [#allocation3], 1

</llo_original>
